<compile_context>
chip_gen: v7x
topology: tpu7x:2x2x1
jax: 0.10.0
libtpu: 0.0.40
codegen_flags: <defaults>
</compile_context>

<pallas_src>
import functools

import jax
import jax.numpy as jnp
from jax.experimental import pallas as pl
from jax.experimental.pallas import tpu as pltpu

VMEM_LIMIT = 32 * 1024 * 1024  # safe on v5e (128 MiB), v6e (128 MiB), v7x (64 MiB)


def _round_up(x, m):
    return (x + m - 1) // m * m


# ---------------------------------------------------------------------------
# Fused 3x3 "same" convolution (+bias, +optional ReLU) kernel.
#   grid = (batch, Cout tiles); the 9 taps (and, for decoder blocks, the two
#   concat segments) are accumulated in-kernel as shifted matmuls from one
#   padded NHWC copy of each input -- no im2col materialization in HBM.
# ---------------------------------------------------------------------------
def _conv3x3_kernel(*refs, n_inputs, H, W, apply_relu):
    x_refs = refs[:n_inputs]
    w_refs = refs[n_inputs:2 * n_inputs]
    b_ref = refs[2 * n_inputs]
    o_ref = refs[2 * n_inputs + 1]
    tc = o_ref.shape[-1]

    acc = jnp.zeros((H * W, tc), jnp.float32)
    for i in range(n_inputs):
        cin = x_refs[i].shape[-1]
        for dy in range(3):
            for dx in range(3):
                win = x_refs[i][0, dy:dy + H, dx:dx + W, :]      # (H, W, Cin) bf16
                win = win.reshape(H * W, cin)
                w_tap = w_refs[i][dy * 3 + dx]                   # (Cin, tc) bf16
                acc = acc + jnp.dot(win, w_tap,
                                    preferred_element_type=jnp.float32)
    out = acc + b_ref[...]                                        # f32 bias
    if apply_relu:
        out = jnp.maximum(out, 0.0)
    o_ref[...] = out.reshape(1, H, W, tc).astype(o_ref.dtype)


def conv3x3(xs, ws, b, relu, out_dtype=jnp.bfloat16):
    """3x3 'same' conv.  xs: list of NHWC inputs; ws: list of (3,3,Cin_i,Cout).

    Passing several (x, w) pairs accumulates them into the same output, which
    fuses the UNet skip-connection channel concat directly into the conv."""
    N, H, W, _ = xs[0].shape
    Cout = ws[0].shape[-1]
    TC = min(256, Cout)
    assert Cout % TC == 0
    n_in = len(xs)

    # TODO(synk): the 1-pixel halo pad is still a wrapper-side HBM copy; it
    # could be folded into the kernel with in-VMEM zero padding.
    xs_p = [jnp.pad(x.astype(jnp.bfloat16), ((0, 0), (1, 1), (1, 1), (0, 0)))
            for x in xs]
    ws_r = [w.astype(jnp.bfloat16).reshape(9, w.shape[2], Cout) for w in ws]
    b2 = b.astype(jnp.float32).reshape(1, Cout)

    in_specs = (
        [pl.BlockSpec((1, H + 2, W + 2, xp.shape[-1]),
                      lambda n, c: (n, 0, 0, 0)) for xp in xs_p]
        + [pl.BlockSpec((9, wr.shape[1], TC),
                        lambda n, c: (0, 0, c)) for wr in ws_r]
        + [pl.BlockSpec((1, TC), lambda n, c: (0, c))]
    )

    cin_total = sum(w.shape[2] for w in ws)
    flops = 2 * N * H * W * 9 * cin_total * Cout
    bytes_accessed = (sum(int(xp.size) * 2 for xp in xs_p)
                      + 9 * cin_total * Cout * 2
                      + N * H * W * Cout * jnp.dtype(out_dtype).itemsize)

    return pl.pallas_call(
        functools.partial(_conv3x3_kernel, n_inputs=n_in, H=H, W=W,
                          apply_relu=relu),
        out_shape=jax.ShapeDtypeStruct((N, H, W, Cout), out_dtype),
        grid_spec=pltpu.PrefetchScalarGridSpec(
            num_scalar_prefetch=0,
            grid=(N, Cout // TC),
            in_specs=in_specs,
            out_specs=pl.BlockSpec((1, H, W, TC), lambda n, c: (n, 0, 0, c)),
        ),
        compiler_params=pltpu.CompilerParams(
            dimension_semantics=("parallel", "parallel"),
            vmem_limit_bytes=VMEM_LIMIT),
        cost_estimate=pl.CostEstimate(flops=flops, transcendentals=0,
                                      bytes_accessed=bytes_accessed),
    )(*xs_p, *ws_r, b2)


# ---------------------------------------------------------------------------
# MaxPool2d(2, 2) — tiled kernel, 4-tap reduction done in VMEM.
# ---------------------------------------------------------------------------
def _maxpool2_kernel(x_ref, o_ref):
    x = x_ref[0]                                      # (H, W, C)
    H, W, C = x.shape
    x = x.reshape(H // 2, 2, W, C)
    x = jnp.maximum(x[:, 0, :, :], x[:, 1, :, :])     # rows   -> (H/2, W, C)
    x = x.reshape(H // 2, W // 2, 2, C)
    o_ref[0] = jnp.maximum(x[:, :, 0, :], x[:, :, 1, :])  # cols -> (H/2, W/2, C)


def maxpool2(x):
    N, H, W, C = x.shape
    assert H % 2 == 0 and W % 2 == 0
    TC = min(128, C)
    assert C % TC == 0
    return pl.pallas_call(
        _maxpool2_kernel,
        out_shape=jax.ShapeDtypeStruct((N, H // 2, W // 2, C), x.dtype),
        grid_spec=pltpu.PrefetchScalarGridSpec(
            num_scalar_prefetch=0,
            grid=(N, C // TC),
            in_specs=[pl.BlockSpec((1, H, W, TC), lambda n, c: (n, 0, 0, c))],
            out_specs=pl.BlockSpec((1, H // 2, W // 2, TC),
                                   lambda n, c: (n, 0, 0, c)),
        ),
        compiler_params=pltpu.CompilerParams(
            dimension_semantics=("parallel", "parallel"),
            vmem_limit_bytes=VMEM_LIMIT),
    )(x)


# ---------------------------------------------------------------------------
# Generic tiled matmul + bias (+ReLU) — used for transpose-conv and 1x1 conv.
# bf16 operands, f32 scratch accumulator, adaptive tile sizes.
# ---------------------------------------------------------------------------
def _matmul_bias_kernel(x_ref, w_ref, b_ref, o_ref, acc_ref, *, apply_relu):
    k = pl.program_id(2)

    @pl.when(k == 0)
    def _():
        acc_ref[...] = jnp.zeros_like(acc_ref)

    acc_ref[...] += jnp.dot(x_ref[...], w_ref[...],
                            preferred_element_type=jnp.float32)

    @pl.when(k == pl.num_programs(2) - 1)
    def _():
        out = acc_ref[...] + b_ref[...]
        if apply_relu:
            out = jnp.maximum(out, 0.0)
        o_ref[...] = out.astype(o_ref.dtype)


def matmul_bias(x, w, b, apply_relu=False, out_dtype=jnp.bfloat16):
    """y = x @ w + b.  x:(M,K) w:(K,N) b:(N,)."""
    M, K = x.shape
    K2, N = w.shape
    assert K == K2
    Kp = _round_up(K, 128)
    tk = next(t for t in (512, 384, 256, 128) if Kp % t == 0)
    tm = 256 if _round_up(M, 128) >= 256 else 128
    tn = 256 if _round_up(N, 128) >= 256 else 128
    Mp, Np = _round_up(M, tm), _round_up(N, tn)

    xp = jnp.pad(x.astype(jnp.bfloat16), ((0, Mp - M), (0, Kp - K)))
    wp = jnp.pad(w.astype(jnp.bfloat16), ((0, Kp - K), (0, Np - N)))
    bp = jnp.pad(b.astype(jnp.float32).reshape(1, N), ((0, 0), (0, Np - N)))

    grid = (Mp // tm, Np // tn, Kp // tk)
    out = pl.pallas_call(
        functools.partial(_matmul_bias_kernel, apply_relu=apply_relu),
        out_shape=jax.ShapeDtypeStruct((Mp, Np), out_dtype),
        grid_spec=pltpu.PrefetchScalarGridSpec(
            num_scalar_prefetch=0,
            grid=grid,
            in_specs=[pl.BlockSpec((tm, tk), lambda i, j, k: (i, k)),
                      pl.BlockSpec((tk, tn), lambda i, j, k: (k, j)),
                      pl.BlockSpec((1, tn), lambda i, j, k: (0, j))],
            out_specs=pl.BlockSpec((tm, tn), lambda i, j, k: (i, j)),
            scratch_shapes=[pltpu.VMEM((tm, tn), jnp.float32)]),
        compiler_params=pltpu.CompilerParams(
            dimension_semantics=("parallel", "parallel", "arbitrary"),
            vmem_limit_bytes=VMEM_LIMIT),
        cost_estimate=pl.CostEstimate(
            flops=2 * M * N * K, transcendentals=0,
            bytes_accessed=M * K * 2 + K * N * 2
            + M * N * jnp.dtype(out_dtype).itemsize),
    )(xp, wp, bp)
    return out[:M, :N]


# ---------------------------------------------------------------------------
# Conv layers built on the matmul kernel.
# ---------------------------------------------------------------------------
def conv_transpose2x2(x, w, b):
    """ConvTranspose2d(kernel=2, stride=2).  x:(N,H,W,Cin)  w:(Cin,2,2,Cout)."""
    N, H, W, Cin = x.shape
    Cout = w.shape[-1]
    w2 = w.reshape(Cin, 4 * Cout)
    b4 = jnp.tile(b, 4)
    y = matmul_bias(x.reshape(N * H * W, Cin), w2, b4, apply_relu=False,
                    out_dtype=jnp.bfloat16)
    # TODO(synk): fold this pixel-shuffle into the matmul's output index_map so
    # the upsampled tensor is written directly as (N, 2H, 2W, Cout).
    y = y.reshape(N, H, W, 2, 2, Cout)
    y = jnp.transpose(y, (0, 1, 3, 2, 4, 5)).reshape(N, 2 * H, 2 * W, Cout)
    return y


def conv1x1(x, w, b, out_dtype=jnp.float32):
    """1x1 conv.  x:(N,H,W,Cin)  w:(Cin,Cout)."""
    N, H, W, Cin = x.shape
    Cout = w.shape[-1]
    y = matmul_bias(x.reshape(N * H * W, Cin), w, b, apply_relu=False,
                    out_dtype=out_dtype)
    return y.reshape(N, H, W, Cout)


# ---------------------------------------------------------------------------
# Deterministic parameter initialization (shapes per UNet.__init__).
# Weights are stored in bf16 (MXU-native), biases in f32.
# ---------------------------------------------------------------------------
def _init_conv3x3(key, cin, cout, fan_in=None):
    kw, kb = jax.random.split(key)
    fan_in = 9 * cin if fan_in is None else fan_in
    std = (2.0 / fan_in) ** 0.5
    w = (jax.random.normal(kw, (3, 3, cin, cout), jnp.float32) * std
         ).astype(jnp.bfloat16)
    b = jax.random.normal(kb, (cout,), jnp.float32) * 0.01
    return w, b


def _init_block(key, cin, cout):
    k1, k2 = jax.random.split(key)
    w1, b1 = _init_conv3x3(k1, cin, cout)
    w2, b2 = _init_conv3x3(k2, cout, cout)
    return dict(w1=w1, b1=b1, w2=w2, b2=b2)


def _init_dec_block(key, c_up, c_skip, cout):
    # First conv of a decoder block: its input channels are [upsampled, skip];
    # store the weight pre-split so the concat can be fused into the conv.
    k1, k2, k3 = jax.random.split(key, 3)
    fan_in = 9 * (c_up + c_skip)
    w1a, b1 = _init_conv3x3(k1, c_up, cout, fan_in=fan_in)
    w1b, _ = _init_conv3x3(k2, c_skip, cout, fan_in=fan_in)
    w2, b2 = _init_conv3x3(k3, cout, cout)
    return dict(w1a=w1a, w1b=w1b, b1=b1, w2=w2, b2=b2)


def _init_upconv(key, cin, cout):
    kw, kb = jax.random.split(key)
    std = (2.0 / (4 * cin)) ** 0.5
    w = (jax.random.normal(kw, (cin, 2, 2, cout), jnp.float32) * std
         ).astype(jnp.bfloat16)
    b = jax.random.normal(kb, (cout,), jnp.float32) * 0.01
    return dict(w=w, b=b)


def init_unet_params(key, in_channels=3, out_channels=1):
    keys = jax.random.split(key, 16)
    params = {
        "enc1": _init_block(keys[0], in_channels, 64),
        "enc2": _init_block(keys[1], 64, 128),
        "enc3": _init_block(keys[2], 128, 256),
        "enc4": _init_block(keys[3], 256, 512),
        "bottleneck": _init_block(keys[4], 512, 1024),
        "up4": _init_upconv(keys[5], 1024, 512),
        "dec4": _init_dec_block(keys[6], 512, 512, 512),
        "up3": _init_upconv(keys[7], 512, 256),
        "dec3": _init_dec_block(keys[8], 256, 256, 256),
        "up2": _init_upconv(keys[9], 256, 128),
        "dec2": _init_dec_block(keys[10], 128, 128, 128),
        "up1": _init_upconv(keys[11], 128, 64),
        "dec1": _init_dec_block(keys[12], 64, 64, 64),
    }
    kw, kb = jax.random.split(keys[13])
    params["final"] = dict(
        w=(jax.random.normal(kw, (64, out_channels), jnp.float32)
           * (2.0 / 64) ** 0.5).astype(jnp.bfloat16),
        b=jax.random.normal(kb, (out_channels,), jnp.float32) * 0.01,
    )
    return params


# ---------------------------------------------------------------------------
# UNet forward (matches the PyTorch module's forward semantics).
# ---------------------------------------------------------------------------
def _conv_block(p, xs):
    if "w1a" in p:  # decoder block: skip-concat fused into the conv itself
        h = conv3x3(xs, [p["w1a"], p["w1b"]], p["b1"], relu=True)
    else:
        h = conv3x3(xs, [p["w1"]], p["b1"], relu=True)
    return conv3x3([h], [p["w2"]], p["b2"], relu=True)


def unet_forward_nhwc(params, x):
    enc1 = _conv_block(params["enc1"], [x])
    enc2 = _conv_block(params["enc2"], [maxpool2(enc1)])
    enc3 = _conv_block(params["enc3"], [maxpool2(enc2)])
    enc4 = _conv_block(params["enc4"], [maxpool2(enc3)])
    bott = _conv_block(params["bottleneck"], [maxpool2(enc4)])

    d4 = conv_transpose2x2(bott, params["up4"]["w"], params["up4"]["b"])
    d4 = _conv_block(params["dec4"], [d4, enc4])
    d3 = conv_transpose2x2(d4, params["up3"]["w"], params["up3"]["b"])
    d3 = _conv_block(params["dec3"], [d3, enc3])
    d2 = conv_transpose2x2(d3, params["up2"]["w"], params["up2"]["b"])
    d2 = _conv_block(params["dec2"], [d2, enc2])
    d1 = conv_transpose2x2(d2, params["up1"]["w"], params["up1"]["b"])
    d1 = _conv_block(params["dec1"], [d1, enc1])

    return conv1x1(d1, params["final"]["w"], params["final"]["b"])


def unet_forward(params, x_nchw):
    x = jnp.transpose(x_nchw, (0, 2, 3, 1)).astype(jnp.bfloat16)  # NCHW -> NHWC
    y = unet_forward_nhwc(params, x)
    return jnp.transpose(y, (0, 3, 1, 2))                         # NHWC -> NCHW


# ---------------------------------------------------------------------------
# Self-checks against plain-JAX references, then run the full model.
# ---------------------------------------------------------------------------
def _sanity_checks(key):
    kx, kx2, kw, kw2, kwt, kb = jax.random.split(key, 6)
    x = jax.random.normal(kx, (2, 8, 8, 16), jnp.float32)
    x2 = jax.random.normal(kx2, (2, 8, 8, 8), jnp.float32)
    w = jax.random.normal(kw, (3, 3, 16, 32), jnp.float32) * 0.2
    wc = jax.random.normal(kw2, (3, 3, 24, 32), jnp.float32) * 0.2
    b = jax.random.normal(kb, (32,), jnp.float32) * 0.1

    def bf(a):  # reference math on the same bf16-quantized operands
        return a.astype(jnp.bfloat16).astype(jnp.float32)

    # 3x3 conv (single input) vs lax.conv
    got = conv3x3([x], [w], b, relu=True).astype(jnp.float32)
    ref = jax.lax.conv_general_dilated(
        bf(x), bf(w), window_strides=(1, 1), padding="SAME",
        dimension_numbers=("NHWC", "HWIO", "NHWC"),
        precision=jax.lax.Precision.HIGHEST) + b
    ref = jnp.maximum(ref, 0.0)
    assert jnp.allclose(got, ref, atol=5e-2, rtol=5e-2), "conv3x3 mismatch"

    # 3x3 conv with fused channel concat (two inputs)
    got2 = conv3x3([x, x2], [wc[:, :, :16, :], wc[:, :, 16:, :]], b,
                   relu=False).astype(jnp.float32)
    ref2 = jax.lax.conv_general_dilated(
        bf(jnp.concatenate([x, x2], axis=-1)), bf(wc),
        window_strides=(1, 1), padding="SAME",
        dimension_numbers=("NHWC", "HWIO", "NHWC"),
        precision=jax.lax.Precision.HIGHEST) + b
    assert jnp.allclose(got2, ref2, atol=5e-2, rtol=5e-2), "fused concat conv mismatch"

    # 2x2 max-pool
    xb = x.astype(jnp.bfloat16)
    got_p = maxpool2(xb).astype(jnp.float32)
    ref_p = jax.lax.reduce_window(xb.astype(jnp.float32), -jnp.inf, jax.lax.max,
                                  (1, 2, 2, 1), (1, 2, 2, 1), "VALID")
    assert jnp.allclose(got_p, ref_p), "maxpool mismatch"

    # 2x2 / stride-2 transpose conv vs einsum reference
    wt = jax.random.normal(kwt, (16, 2, 2, 8), jnp.float32) * 0.2
    bt = jax.random.normal(kb, (8,), jnp.float32) * 0.1
    got_t = conv_transpose2x2(x, wt, bt).astype(jnp.float32)
    ref_t = jnp.einsum("nhwc,cyxo->nhywxo", bf(x), bf(wt),
                       precision=jax.lax.Precision.HIGHEST)
    ref_t = ref_t.reshape(2, 16, 16, 8) + bt
    assert jnp.allclose(got_t, ref_t, atol=5e-2, rtol=5e-2), "convT mismatch"


if __name__ == "__main__":
    key = jax.random.PRNGKey(0)
    k_params, k_input, k_check = jax.random.split(key, 3)

    _sanity_checks(k_check)

    params = init_unet_params(k_params, in_channels=3, out_channels=1)
    # Small input consistent with the module: NCHW, 4 pooling levels -> 16x16.
    x = jax.random.normal(k_input, (2, 3, 16, 16), jnp.float32)

    fwd = jax.jit(lambda xx: unet_forward(params, xx))
    out = jax.block_until_ready(fwd(x))

    assert out.shape == (2, 1, 16, 16), out.shape
    assert bool(jnp.isfinite(out).all())
    print("KERNEL_OK")
</pallas_src>

<mosaic_0001>
module attributes {stable_mosaic.version = 11 : i64} {
  func.func @_conv3x3_kernel(%arg0: i32, %arg1: i32, %arg2: memref<1x10x10x16xbf16, #tpu.memory_space<vmem>>, %arg3: memref<9x16x32xbf16, #tpu.memory_space<vmem>>, %arg4: memref<1x32xf32, #tpu.memory_space<vmem>>, %arg5: memref<1x8x8x32xbf16, #tpu.memory_space<vmem>>) attributes {dimension_semantics = [#tpu.dimension_semantics<parallel>, #tpu.dimension_semantics<parallel>], iteration_bounds = array<i64: 2, 1>, scalar_prefetch = 0 : i64, scratch_operands = 0 : i64, tpu.core_type = #tpu.core_type<tc>, window_params = [{transform_indices = @transform_0, window_bounds = array<i64: 1, 10, 10, 16>}, {transform_indices = @transform_1, window_bounds = array<i64: 9, 16, 32>}, {transform_indices = @transform_2, window_bounds = array<i64: 1, 32>}, {transform_indices = @transform_3, window_bounds = array<i64: 1, 8, 8, 32>}]} {
    %cst = arith.constant 0.000000e+00 : f32
    %0 = vector.broadcast %cst : f32 to vector<64x32xf32>
    %c0 = arith.constant 0 : index
    %c0_0 = arith.constant 0 : index
    %c0_1 = arith.constant 0 : index
    %c0_2 = arith.constant 0 : index
    %1 = vector.load %arg2[%c0, %c0_0, %c0_1, %c0_2] : memref<1x10x10x16xbf16, #tpu.memory_space<vmem>>, vector<1x8x8x16xbf16>
    %2 = vector.shape_cast %1 : vector<1x8x8x16xbf16> to vector<8x8x16xbf16>
    %3 = vector.shape_cast %2 : vector<8x8x16xbf16> to vector<64x16xbf16>
    %c0_3 = arith.constant 0 : index
    %c0_4 = arith.constant 0 : index
    %c0_5 = arith.constant 0 : index
    %4 = vector.load %arg3[%c0_3, %c0_4, %c0_5] : memref<9x16x32xbf16, #tpu.memory_space<vmem>>, vector<1x16x32xbf16>
    %5 = vector.shape_cast %4 : vector<1x16x32xbf16> to vector<16x32xbf16>
    %cst_6 = arith.constant dense<0.000000e+00> : vector<64x32xf32>
    %6 = tpu.matmul %3, %5, %cst_6 {dimension_numbers = #tpu.dot_dimension_numbers<[1], [0], [0], [1], [0, 0, 1, 1], [], []>} : vector<64x16xbf16>, vector<16x32xbf16>, vector<64x32xf32> -> vector<64x32xf32>
    %7 = arith.addf %0, %6 : vector<64x32xf32>
    %c0_7 = arith.constant 0 : index
    %c0_8 = arith.constant 0 : index
    %c1 = arith.constant 1 : index
    %c0_9 = arith.constant 0 : index
    %8 = vector.load %arg2[%c0_7, %c0_8, %c1, %c0_9] : memref<1x10x10x16xbf16, #tpu.memory_space<vmem>>, vector<1x8x8x16xbf16>
    %9 = vector.shape_cast %8 : vector<1x8x8x16xbf16> to vector<8x8x16xbf16>
    %10 = vector.shape_cast %9 : vector<8x8x16xbf16> to vector<64x16xbf16>
    %c1_10 = arith.constant 1 : index
    %c0_11 = arith.constant 0 : index
    %c0_12 = arith.constant 0 : index
    %11 = vector.load %arg3[%c1_10, %c0_11, %c0_12] : memref<9x16x32xbf16, #tpu.memory_space<vmem>>, vector<1x16x32xbf16>
    %12 = vector.shape_cast %11 : vector<1x16x32xbf16> to vector<16x32xbf16>
    %cst_13 = arith.constant dense<0.000000e+00> : vector<64x32xf32>
    %13 = tpu.matmul %10, %12, %cst_13 {dimension_numbers = #tpu.dot_dimension_numbers<[1], [0], [0], [1], [0, 0, 1, 1], [], []>} : vector<64x16xbf16>, vector<16x32xbf16>, vector<64x32xf32> -> vector<64x32xf32>
    %14 = arith.addf %7, %13 : vector<64x32xf32>
    %c0_14 = arith.constant 0 : index
    %c0_15 = arith.constant 0 : index
    %c2 = arith.constant 2 : index
    %c0_16 = arith.constant 0 : index
    %15 = vector.load %arg2[%c0_14, %c0_15, %c2, %c0_16] : memref<1x10x10x16xbf16, #tpu.memory_space<vmem>>, vector<1x8x8x16xbf16>
    %16 = vector.shape_cast %15 : vector<1x8x8x16xbf16> to vector<8x8x16xbf16>
    %17 = vector.shape_cast %16 : vector<8x8x16xbf16> to vector<64x16xbf16>
    %c2_17 = arith.constant 2 : index
    %c0_18 = arith.constant 0 : index
    %c0_19 = arith.constant 0 : index
    %18 = vector.load %arg3[%c2_17, %c0_18, %c0_19] : memref<9x16x32xbf16, #tpu.memory_space<vmem>>, vector<1x16x32xbf16>
    %19 = vector.shape_cast %18 : vector<1x16x32xbf16> to vector<16x32xbf16>
    %cst_20 = arith.constant dense<0.000000e+00> : vector<64x32xf32>
    %20 = tpu.matmul %17, %19, %cst_20 {dimension_numbers = #tpu.dot_dimension_numbers<[1], [0], [0], [1], [0, 0, 1, 1], [], []>} : vector<64x16xbf16>, vector<16x32xbf16>, vector<64x32xf32> -> vector<64x32xf32>
    %21 = arith.addf %14, %20 : vector<64x32xf32>
    %c0_21 = arith.constant 0 : index
    %c1_22 = arith.constant 1 : index
    %c0_23 = arith.constant 0 : index
    %c0_24 = arith.constant 0 : index
    %22 = vector.load %arg2[%c0_21, %c1_22, %c0_23, %c0_24] : memref<1x10x10x16xbf16, #tpu.memory_space<vmem>>, vector<1x8x8x16xbf16>
    %23 = vector.shape_cast %22 : vector<1x8x8x16xbf16> to vector<8x8x16xbf16>
    %24 = vector.shape_cast %23 : vector<8x8x16xbf16> to vector<64x16xbf16>
    %c3 = arith.constant 3 : index
    %c0_25 = arith.constant 0 : index
    %c0_26 = arith.constant 0 : index
    %25 = vector.load %arg3[%c3, %c0_25, %c0_26] : memref<9x16x32xbf16, #tpu.memory_space<vmem>>, vector<1x16x32xbf16>
    %26 = vector.shape_cast %25 : vector<1x16x32xbf16> to vector<16x32xbf16>
    %cst_27 = arith.constant dense<0.000000e+00> : vector<64x32xf32>
    %27 = tpu.matmul %24, %26, %cst_27 {dimension_numbers = #tpu.dot_dimension_numbers<[1], [0], [0], [1], [0, 0, 1, 1], [], []>} : vector<64x16xbf16>, vector<16x32xbf16>, vector<64x32xf32> -> vector<64x32xf32>
    %28 = arith.addf %21, %27 : vector<64x32xf32>
    %c0_28 = arith.constant 0 : index
    %c1_29 = arith.constant 1 : index
    %c1_30 = arith.constant 1 : index
    %c0_31 = arith.constant 0 : index
    %29 = vector.load %arg2[%c0_28, %c1_29, %c1_30, %c0_31] : memref<1x10x10x16xbf16, #tpu.memory_space<vmem>>, vector<1x8x8x16xbf16>
    %30 = vector.shape_cast %29 : vector<1x8x8x16xbf16> to vector<8x8x16xbf16>
    %31 = vector.shape_cast %30 : vector<8x8x16xbf16> to vector<64x16xbf16>
    %c4 = arith.constant 4 : index
    %c0_32 = arith.constant 0 : index
    %c0_33 = arith.constant 0 : index
    %32 = vector.load %arg3[%c4, %c0_32, %c0_33] : memref<9x16x32xbf16, #tpu.memory_space<vmem>>, vector<1x16x32xbf16>
    %33 = vector.shape_cast %32 : vector<1x16x32xbf16> to vector<16x32xbf16>
    %cst_34 = arith.constant dense<0.000000e+00> : vector<64x32xf32>
    %34 = tpu.matmul %31, %33, %cst_34 {dimension_numbers = #tpu.dot_dimension_numbers<[1], [0], [0], [1], [0, 0, 1, 1], [], []>} : vector<64x16xbf16>, vector<16x32xbf16>, vector<64x32xf32> -> vector<64x32xf32>
    %35 = arith.addf %28, %34 : vector<64x32xf32>
    %c0_35 = arith.constant 0 : index
    %c1_36 = arith.constant 1 : index
    %c2_37 = arith.constant 2 : index
    %c0_38 = arith.constant 0 : index
    %36 = vector.load %arg2[%c0_35, %c1_36, %c2_37, %c0_38] : memref<1x10x10x16xbf16, #tpu.memory_space<vmem>>, vector<1x8x8x16xbf16>
    %37 = vector.shape_cast %36 : vector<1x8x8x16xbf16> to vector<8x8x16xbf16>
    %38 = vector.shape_cast %37 : vector<8x8x16xbf16> to vector<64x16xbf16>
    %c5 = arith.constant 5 : index
    %c0_39 = arith.constant 0 : index
    %c0_40 = arith.constant 0 : index
    %39 = vector.load %arg3[%c5, %c0_39, %c0_40] : memref<9x16x32xbf16, #tpu.memory_space<vmem>>, vector<1x16x32xbf16>
    %40 = vector.shape_cast %39 : vector<1x16x32xbf16> to vector<16x32xbf16>
    %cst_41 = arith.constant dense<0.000000e+00> : vector<64x32xf32>
    %41 = tpu.matmul %38, %40, %cst_41 {dimension_numbers = #tpu.dot_dimension_numbers<[1], [0], [0], [1], [0, 0, 1, 1], [], []>} : vector<64x16xbf16>, vector<16x32xbf16>, vector<64x32xf32> -> vector<64x32xf32>
    %42 = arith.addf %35, %41 : vector<64x32xf32>
    %c0_42 = arith.constant 0 : index
    %c2_43 = arith.constant 2 : index
    %c0_44 = arith.constant 0 : index
    %c0_45 = arith.constant 0 : index
    %43 = vector.load %arg2[%c0_42, %c2_43, %c0_44, %c0_45] : memref<1x10x10x16xbf16, #tpu.memory_space<vmem>>, vector<1x8x8x16xbf16>
    %44 = vector.shape_cast %43 : vector<1x8x8x16xbf16> to vector<8x8x16xbf16>
    %45 = vector.shape_cast %44 : vector<8x8x16xbf16> to vector<64x16xbf16>
    %c6 = arith.constant 6 : index
    %c0_46 = arith.constant 0 : index
    %c0_47 = arith.constant 0 : index
    %46 = vector.load %arg3[%c6, %c0_46, %c0_47] : memref<9x16x32xbf16, #tpu.memory_space<vmem>>, vector<1x16x32xbf16>
    %47 = vector.shape_cast %46 : vector<1x16x32xbf16> to vector<16x32xbf16>
    %cst_48 = arith.constant dense<0.000000e+00> : vector<64x32xf32>
    %48 = tpu.matmul %45, %47, %cst_48 {dimension_numbers = #tpu.dot_dimension_numbers<[1], [0], [0], [1], [0, 0, 1, 1], [], []>} : vector<64x16xbf16>, vector<16x32xbf16>, vector<64x32xf32> -> vector<64x32xf32>
    %49 = arith.addf %42, %48 : vector<64x32xf32>
    %c0_49 = arith.constant 0 : index
    %c2_50 = arith.constant 2 : index
    %c1_51 = arith.constant 1 : index
    %c0_52 = arith.constant 0 : index
    %50 = vector.load %arg2[%c0_49, %c2_50, %c1_51, %c0_52] : memref<1x10x10x16xbf16, #tpu.memory_space<vmem>>, vector<1x8x8x16xbf16>
    %51 = vector.shape_cast %50 : vector<1x8x8x16xbf16> to vector<8x8x16xbf16>
    %52 = vector.shape_cast %51 : vector<8x8x16xbf16> to vector<64x16xbf16>
    %c7 = arith.constant 7 : index
    %c0_53 = arith.constant 0 : index
    %c0_54 = arith.constant 0 : index
    %53 = vector.load %arg3[%c7, %c0_53, %c0_54] : memref<9x16x32xbf16, #tpu.memory_space<vmem>>, vector<1x16x32xbf16>
    %54 = vector.shape_cast %53 : vector<1x16x32xbf16> to vector<16x32xbf16>
    %cst_55 = arith.constant dense<0.000000e+00> : vector<64x32xf32>
    %55 = tpu.matmul %52, %54, %cst_55 {dimension_numbers = #tpu.dot_dimension_numbers<[1], [0], [0], [1], [0, 0, 1, 1], [], []>} : vector<64x16xbf16>, vector<16x32xbf16>, vector<64x32xf32> -> vector<64x32xf32>
    %56 = arith.addf %49, %55 : vector<64x32xf32>
    %c0_56 = arith.constant 0 : index
    %c2_57 = arith.constant 2 : index
    %c2_58 = arith.constant 2 : index
    %c0_59 = arith.constant 0 : index
    %57 = vector.load %arg2[%c0_56, %c2_57, %c2_58, %c0_59] : memref<1x10x10x16xbf16, #tpu.memory_space<vmem>>, vector<1x8x8x16xbf16>
    %58 = vector.shape_cast %57 : vector<1x8x8x16xbf16> to vector<8x8x16xbf16>
    %59 = vector.shape_cast %58 : vector<8x8x16xbf16> to vector<64x16xbf16>
    %c8 = arith.constant 8 : index
    %c0_60 = arith.constant 0 : index
    %c0_61 = arith.constant 0 : index
    %60 = vector.load %arg3[%c8, %c0_60, %c0_61] : memref<9x16x32xbf16, #tpu.memory_space<vmem>>, vector<1x16x32xbf16>
    %61 = vector.shape_cast %60 : vector<1x16x32xbf16> to vector<16x32xbf16>
    %cst_62 = arith.constant dense<0.000000e+00> : vector<64x32xf32>
    %62 = tpu.matmul %59, %61, %cst_62 {dimension_numbers = #tpu.dot_dimension_numbers<[1], [0], [0], [1], [0, 0, 1, 1], [], []>} : vector<64x16xbf16>, vector<16x32xbf16>, vector<64x32xf32> -> vector<64x32xf32>
    %63 = arith.addf %56, %62 : vector<64x32xf32>
    %c0_63 = arith.constant 0 : index
    %c0_64 = arith.constant 0 : index
    %64 = vector.load %arg4[%c0_63, %c0_64] : memref<1x32xf32, #tpu.memory_space<vmem>>, vector<1x32xf32>
    %65 = vector.broadcast %64 : vector<1x32xf32> to vector<64x32xf32>
    %66 = arith.addf %63, %65 : vector<64x32xf32>
    %cst_65 = arith.constant 0.000000e+00 : f32
    %67 = vector.broadcast %cst_65 : f32 to vector<64x32xf32>
    %68 = arith.maximumf %66, %67 : vector<64x32xf32>
    %69 = vector.shape_cast %68 : vector<64x32xf32> to vector<1x8x8x32xf32>
    %70 = arith.truncf %69 : vector<1x8x8x32xf32> to vector<1x8x8x32xbf16>
    %c0_66 = arith.constant 0 : index
    %c0_67 = arith.constant 0 : index
    %c0_68 = arith.constant 0 : index
    %c0_69 = arith.constant 0 : index
    %71 = vector.load %arg5[%c0_66, %c0_67, %c0_68, %c0_69] : memref<1x8x8x32xbf16, #tpu.memory_space<vmem>>, vector<1x8x8x32xbf16>
    tpu.vector_store %arg5[%c0_66, %c0_67, %c0_68, %c0_69], %70 {strides = array<i32>} : memref<1x8x8x32xbf16, #tpu.memory_space<vmem>>, vector<1x8x8x32xbf16>,
    return
  }
  func.func @transform_0(%arg0: i32, %arg1: i32) -> (i32, i32, i32, i32) {
    %c0_i32 = arith.constant 0 : i32
    %c0_i32_0 = arith.constant 0 : i32
    %c0_i32_1 = arith.constant 0 : i32
    %c0_i32_2 = arith.constant 0 : i32
    return %arg0, %c0_i32, %c0_i32_0, %c0_i32_1 : i32, i32, i32, i32
  }
  func.func @transform_1(%arg0: i32, %arg1: i32) -> (i32, i32, i32) {
    %c0_i32 = arith.constant 0 : i32
    %c0_i32_0 = arith.constant 0 : i32
    %c0_i32_1 = arith.constant 0 : i32
    return %c0_i32, %c0_i32_0, %arg1 : i32, i32, i32
  }
  func.func @transform_2(%arg0: i32, %arg1: i32) -> (i32, i32) {
    %c0_i32 = arith.constant 0 : i32
    %c0_i32_0 = arith.constant 0 : i32
    return %c0_i32, %arg1 : i32, i32
  }
  func.func @transform_3(%arg0: i32, %arg1: i32) -> (i32, i32, i32, i32) {
    %c0_i32 = arith.constant 0 : i32
    %c0_i32_0 = arith.constant 0 : i32
    %c0_i32_1 = arith.constant 0 : i32
    return %arg0, %c0_i32, %c0_i32_0, %arg1 : i32, i32, i32, i32
  }
}

</mosaic_0001>

<llo_original>
// kernel: tpu_custom_call.1
$region0: #{tpu_custom_call.1}
  #allocation0 [shape = 'u32[]', space=smem, size = 0x4, offset = 0x4, fixed_abs, tag = 'smem constant byte address 0x4 - core index']
  #allocation1 [shape = 'u32[144,128]{1,0:T(1,128)}', space=vmem, size = 0x12000, scoped, tag = 'internal scratch']
  %s0 = inlined_call_operand.vmem [shape: bf16[2,10,10,16], index: 0, kind: input, shape index: {}]
  %s1 = inlined_call_operand.vmem [shape: bf16[9,16,32], index: 1, kind: input, shape index: {}]
  %s2 = inlined_call_operand.vmem [shape: f32[1,32], index: 2, kind: input, shape index: {}]
  %s3 = inlined_call_operand.hbm [shape: bf16[2,8,8,32], index: 3, kind: output, shape index: {}]
  %s4 = sld [smem:[#allocation0]]
  $region45: #{tpu_custom_call.1} parent=0
    _
  %s6 = ssub.s32 1, %s4
  %s7 = scalar_select 0, %s6, %s4
  $region1: #{tpu_custom_call.1} parent=0
    #allocation2 [shape = 'u8[32768]{0}', space=vmem, size = 0x8000, scoped, tag = 'output window, operand 0']
    #allocation3 [shape = 's32[2]{0}', space=sflag, size = 0x8, scoped, tag = 'scoped memory for tpu_custom_call.1']
    %8 = vsyncpa [#allocation3], 0
    %s9 = scalar_lea.sflag [#allocation3], 1
    %10 = vsyncpa %s9, 0
    loop: start=0, step=1, limit=4
    $region2: #{tpu_custom_call.1} parent=1 // loop_pre_header
      _
    $region3: #{tpu_custom_call.1} parent=1 // loop_header
      %s12 = sphi 0, %s16
      %p13 = scmp.ge.s32.totalorder %s12, 4
      %s19 = sphi 0, %s31
      %s20 = sphi 0, %s27
      %s21 = sphi 0, %s19
      %s22 = sphi 0, %s20
      %s23 = sphi 0, %s21
      %s24 = sphi 0, %s22
      %s34 = sphi 0, %s36
      %s37 = sphi 0, %s34
      %s38 = sphi 0, %s37
      %s54 = sphi 0, %s38
      %s60 = sphi 0, %s62
      %s63 = sphi 0, %s60
      %s64 = sphi 0, %s63
      %s80 = sphi 0, %s64
      %s86 = sphi 0, %s88
      %s89 = sphi 0, %s86
      %s90 = sphi 0, %s89
      %s106 = sphi 0, %s90
      %s114 = sphi 0, %s116
      %s117 = sphi 0, %s114
      %s118 = sphi 0, %s117
      %s134 = sphi 0, %s118
    $region4: #{tpu_custom_call.1} parent=1 // loop_header_branch
      %15 = sbr.rel (%p13) target = $region8
    $region5: #{tpu_custom_call.1} parent=1 // loop_body
      %s17 = ssub.s32 %s12, 1
      %s18 = ssub.s32 %s12, 2
      %s25 = sadd.s32 1, %s20
      %p26 = scmp.ge.s32.totalorder %s25, 1
      %s27 = scalar_select %p26, 0, %s25
      %s28 = sadd.s32 1, %s19
      %s29 = scalar_select %p26, %s28, %s19
      %p30 = scmp.ge.s32.totalorder %s29, 2
      %s31 = scalar_select %p30, 0, %s29
      %s32 = ssub.s32 %s19, %s31
      %p33 = scmp.eq.s32.totalorder %s32, 0
      %s35 = sadd.s32 %s34, 1
      %s36 = scalar_select %p33, %s34, %s35
      %p39 = pneg %p33
      %p40 = scmp.eq.s32.totalorder %s12, 1
      %p41 = por %p39, %p40
      %p42 = scmp.ne.s32.totalorder %s34, %s37
      %p43 = scmp.eq.s32.totalorder %s12, 0
      %p44 = por %p42, %p43
      %p45 = scmp.ne.s32.totalorder %s34, %s37
      %p46 = scmp.eq.s32.totalorder %s17, 1
      %p47 = por %p45, %p46
      %p48 = scmp.ne.s32.totalorder %s37, %s38
      %p49 = scmp.eq.s32.totalorder %s17, 0
      %p50 = por %p48, %p49
      %p51 = scmp.ne.s32.totalorder %s37, %s38
      %p52 = scmp.eq.s32.totalorder %s18, 1
      %p53 = por %p51, %p52
      %p55 = scmp.ne.s32.totalorder %s38, %s54
      %p56 = scmp.eq.s32.totalorder %s18, 0
      %p57 = por %p55, %p56
      %s58 = ssub.s32 %s20, %s27
      %p59 = scmp.eq.s32.totalorder %s58, 0
      %s61 = sadd.s32 %s60, 1
      %s62 = scalar_select %p59, %s60, %s61
      %p65 = pneg %p59
      %p66 = scmp.eq.s32.totalorder %s12, 1
      %p67 = por %p65, %p66
      %p68 = scmp.ne.s32.totalorder %s60, %s63
      %p69 = scmp.eq.s32.totalorder %s12, 0
      %p70 = por %p68, %p69
      %p71 = scmp.ne.s32.totalorder %s60, %s63
      %p72 = scmp.eq.s32.totalorder %s17, 1
      %p73 = por %p71, %p72
      %p74 = scmp.ne.s32.totalorder %s63, %s64
      %p75 = scmp.eq.s32.totalorder %s17, 0
      %p76 = por %p74, %p75
      %p77 = scmp.ne.s32.totalorder %s63, %s64
      %p78 = scmp.eq.s32.totalorder %s18, 1
      %p79 = por %p77, %p78
      %p81 = scmp.ne.s32.totalorder %s64, %s80
      %p82 = scmp.eq.s32.totalorder %s18, 0
      %p83 = por %p81, %p82
      %s84 = ssub.s32 %s20, %s27
      %p85 = scmp.eq.s32.totalorder %s84, 0
      %s87 = sadd.s32 %s86, 1
      %s88 = scalar_select %p85, %s86, %s87
      %p91 = pneg %p85
      %p92 = scmp.eq.s32.totalorder %s12, 1
      %p93 = por %p91, %p92
      %p94 = scmp.ne.s32.totalorder %s86, %s89
      %p95 = scmp.eq.s32.totalorder %s12, 0
      %p96 = por %p94, %p95
      %p97 = scmp.ne.s32.totalorder %s86, %s89
      %p98 = scmp.eq.s32.totalorder %s17, 1
      %p99 = por %p97, %p98
      %p100 = scmp.ne.s32.totalorder %s89, %s90
      %p101 = scmp.eq.s32.totalorder %s17, 0
      %p102 = por %p100, %p101
      %p103 = scmp.ne.s32.totalorder %s89, %s90
      %p104 = scmp.eq.s32.totalorder %s18, 1
      %p105 = por %p103, %p104
      %p107 = scmp.ne.s32.totalorder %s90, %s106
      %p108 = scmp.eq.s32.totalorder %s18, 0
      %p109 = por %p107, %p108
      %s110 = ssub.s32 %s19, %s31
      %s111 = ssub.s32 %s20, %s27
      %s112 = sor.u32 %s110, %s111
      %p113 = scmp.eq.s32.totalorder %s112, 0
      %s115 = sadd.s32 %s114, 1
      %s116 = scalar_select %p113, %s114, %s115
      %p119 = pneg %p113
      %p120 = scmp.eq.s32.totalorder %s12, 1
      %p121 = por %p119, %p120
      %p122 = scmp.ne.s32.totalorder %s114, %s117
      %p123 = scmp.eq.s32.totalorder %s12, 0
      %p124 = por %p122, %p123
      %p125 = scmp.ne.s32.totalorder %s114, %s117
      %p126 = scmp.eq.s32.totalorder %s17, 1
      %p127 = por %p125, %p126
      %p128 = scmp.ne.s32.totalorder %s117, %s118
      %p129 = scmp.eq.s32.totalorder %s17, 0
      %p130 = por %p128, %p129
      %p131 = scmp.ne.s32.totalorder %s117, %s118
      %p132 = scmp.eq.s32.totalorder %s18, 1
      %p133 = por %p131, %p132
      %p135 = scmp.ne.s32.totalorder %s118, %s134
      %p136 = scmp.eq.s32.totalorder %s18, 0
      %p137 = por %p135, %p136
      %p138 = scmp.le.s32.totalorder 1, %s12
      %p139 = scmp.lt.s32.totalorder %s12, 3
      %p140 = pnand %p138, %p139
      %p141 = pneg %p140
      // Predicated region
      $region9: #{tpu_custom_call.1} parent=5 // pred_check
        _
      $region10: #{tpu_custom_call.1} parent=5 // pred_check_branch
        %143 = sbr.rel (%p140) target = $region12
      $region11: #{tpu_custom_call.1} parent=5 // pred_region
        %s144 = ssub.s32 %s12, 1
        // Predicated region
        $region13: #{tpu_custom_call.1} parent=11 // pred_check
          %p145 = pneg %p76
        $region14: #{tpu_custom_call.1} parent=11 // pred_check_branch
          %147 = sbr.rel (%p145) target = $region16
        $region15: #{tpu_custom_call.1} parent=11 // pred_region
          %p148 = scmp.lt.s32.totalorder %s22, 0
          %s149 = scalar_select %p148, %s22, 0
          %s150 = smul.addr %s149, 4
          %s151 = scalar_lea.vmem %s1, %s150
        $region16: #{tpu_custom_call.1} parent=11 // pred_fallthru
          _
        // Predicated region
        $region17: #{tpu_custom_call.1} parent=11 // pred_check
          %p152 = pneg %p102
        $region18: #{tpu_custom_call.1} parent=11 // pred_check_branch
          %154 = sbr.rel (%p152) target = $region20
        $region19: #{tpu_custom_call.1} parent=11 // pred_region
          %p155 = scmp.lt.s32.totalorder %s22, 0
          %s156 = scalar_select %p155, %s22, 0
          %s157 = scalar_lea.vmem %s2, %s156
        $region20: #{tpu_custom_call.1} parent=11 // pred_fallthru
          _
      $region12: #{tpu_custom_call.1} parent=5 // pred_fallthru
        _
      %p158 = scmp.lt.s32.totalorder %s12, 2
      // Predicated region
      $region21: #{tpu_custom_call.1} parent=5 // pred_check
        %p159 = pneg %p158
      $region22: #{tpu_custom_call.1} parent=5 // pred_check_branch
        %161 = sbr.rel (%p159) target = $region24
      $region23: #{tpu_custom_call.1} parent=5 // pred_region
        // Predicated region
        $region25: #{tpu_custom_call.1} parent=23 // pred_check
          %p162 = pneg %p44
        $region26: #{tpu_custom_call.1} parent=23 // pred_check_branch
          %164 = sbr.rel (%p162) target = $region28
        $region27: #{tpu_custom_call.1} parent=23 // pred_region
          %p165 = scmp.lt.s32.totalorder %s19, 1
          %s166 = scalar_select %p165, %s19, 1
          %s167 = smul.addr %s166, 20
          %s168 = smul.addr %s167, 4
          %s169 = scalar_lea.vmem %s0, %s168
        $region28: #{tpu_custom_call.1} parent=23 // pred_fallthru
          _
      $region24: #{tpu_custom_call.1} parent=5 // pred_fallthru
        _
      %p170 = scmp.le.s32.totalorder 1, %s12
      %p171 = scmp.lt.s32.totalorder %s12, 3
      %p172 = pnand %p170, %p171
      %p173 = pneg %p172
      // Predicated region
      $region29: #{tpu_custom_call.1} parent=5 // pred_check
        _
      $region30: #{tpu_custom_call.1} parent=5 // pred_check_branch
        %175 = sbr.rel (%p172) target = $region32
      $region31: #{tpu_custom_call.1} parent=5 // pred_region
        %s176 = ssub.s32 %s12, 1
        %p177 = scmp.lt.s32.totalorder %s21, 1
        %s178 = scalar_select %p177, %s21, 1
        %s179 = smul.addr %s178, 20
        %s180 = smul.addr %s179, 4
        %s181 = scalar_lea.vmem %s0, %s180
        %p182 = pneg %p50
        %p183 = pneg %p47
        %p184 = scmp.lt.s32.totalorder %s22, 0
        %s185 = scalar_select %p184, %s22, 0
        %s186 = smul.addr %s185, 4
        %s187 = scalar_lea.vmem %s1, %s186
        %p188 = pneg %p76
        %p189 = pneg %p73
        %p190 = scmp.lt.s32.totalorder %s22, 0
        %s191 = scalar_select %p190, %s22, 0
        %s192 = scalar_lea.vmem %s2, %s191
        %p193 = pneg %p102
        %p194 = pneg %p99
        %p195 = pneg %p130
        %p196 = pneg %p127
        %s197 = sand.u32 %s117, 1
        %s198 = scalar_lea.sflag [#allocation3], %s197
        %s199 = sand.u32 %s117, 1
        %s200 = smul.addr %s199, 32
        %s201 = scalar_lea.vmem [#allocation2], %s200
        %p202 = scmp.lt.s32.totalorder %s21, 1
        %s203 = scalar_select %p202, %s21, 1
        %s204 = smul.addr %s203, 20
        %s205 = smul.addr %s204, 4
        %s206 = scalar_lea.vmem %s0, %s205
        %p207 = scmp.lt.s32.totalorder %s22, 0
        %s208 = scalar_select %p207, %s22, 0
        %s209 = smul.addr %s208, 4
        %s210 = scalar_lea.vmem %s1, %s209
        %p211 = scmp.lt.s32.totalorder %s22, 0
        %s212 = scalar_select %p211, %s22, 0
        %s213 = scalar_lea.vmem %s2, %s212
        %v215 = vld [vmem:[%s206] sm:$0xf]
        %v216 = vld [vmem:[%s206 + $0x8] sm:$0xf]
        %v217 = vld [vmem:[%s206 + $0x10] sm:$0xf]
        %v218 = vld [vmem:[%s206 + $0x18] sm:$0xf]
        %v219 = vld [vmem:[%s206 + $0x20] sm:$0xf]
        %v220 = vld [vmem:[%s206 + $0x28] sm:$0xf]
        %v221 = vld [vmem:[%s206 + $0x30] sm:$0xf]
        %v222 = vld [vmem:[%s206 + $0x38] sm:$0xf]
        %v223 = vld [vmem:[%s210] sm:$0xf]
        %v224 = vld [vmem:[%s210 + $0x4] sm:$0xf]
        %v225 = vld [vmem:[%s206 + $0x4] sm:$0x1]
        %v226 = vld [vmem:[%s206 + $0xc] sm:$0x1]
        %v227 = vld [vmem:[%s206 + $0x14] sm:$0x1]
        %v228 = vld [vmem:[%s206 + $0x1c] sm:$0x1]
        %v229 = vld [vmem:[%s206 + $0x24] sm:$0x1]
        %v230 = vld [vmem:[%s206 + $0x2c] sm:$0x1]
        %v231 = vld [vmem:[%s206 + $0x34] sm:$0x1]
        %v232 = vld [vmem:[%s206 + $0x3c] sm:$0x1]
        %vm233 = vsmask.f32 3328
        %vm234 = vsmask.f32 7440
        %vm235 = vmor %vm233, %vm234
        %v237 = vshrl.u32 %v215, 16
        %v239 = vrot.slane %v237, 4
        %v240 = vshll.u32 %v215, 16
        %v242 = vrot.slane %v240, 5
        %v243 = vor.u32 %v239, %v242
        %v244 = vrot.slane %v243, 4
        %v246 = vshll.u32 %v225, 16
        %v248 = vrot.slane %v246, 5
        %v249 = vsel %vm235, %v244, %v248
        %v251 = vshrl.u32 %v216, 16
        %v253 = vrot.slane %v251, 4
        %v254 = vshll.u32 %v216, 16
        %v256 = vrot.slane %v254, 5
        %v257 = vor.u32 %v253, %v256
        %v258 = vrot.slane %v257, 4
        %v260 = vshll.u32 %v226, 16
        %v262 = vrot.slane %v260, 5
        %v263 = vsel %vm235, %v258, %v262
        %v265 = vshrl.u32 %v217, 16
        %v267 = vrot.slane %v265, 4
        %v268 = vshll.u32 %v217, 16
        %v270 = vrot.slane %v268, 5
        %v271 = vor.u32 %v267, %v270
        %v272 = vrot.slane %v271, 4
        %v274 = vshll.u32 %v227, 16
        %v276 = vrot.slane %v274, 5
        %v277 = vsel %vm235, %v272, %v276
        %v279 = vshrl.u32 %v218, 16
        %v281 = vrot.slane %v279, 4
        %v282 = vshll.u32 %v218, 16
        %v284 = vrot.slane %v282, 5
        %v285 = vor.u32 %v281, %v284
        %v286 = vrot.slane %v285, 4
        %v288 = vshll.u32 %v228, 16
        %v290 = vrot.slane %v288, 5
        %v291 = vsel %vm235, %v286, %v290
        %v293 = vshrl.u32 %v219, 16
        %v295 = vrot.slane %v293, 4
        %v296 = vshll.u32 %v219, 16
        %v298 = vrot.slane %v296, 5
        %v299 = vor.u32 %v295, %v298
        %v300 = vrot.slane %v299, 4
        %v302 = vshll.u32 %v229, 16
        %v304 = vrot.slane %v302, 5
        %v305 = vsel %vm235, %v300, %v304
        %v307 = vshrl.u32 %v220, 16
        %v309 = vrot.slane %v307, 4
        %v310 = vshll.u32 %v220, 16
        %v312 = vrot.slane %v310, 5
        %v313 = vor.u32 %v309, %v312
        %v314 = vrot.slane %v313, 4
        %v316 = vshll.u32 %v230, 16
        %v318 = vrot.slane %v316, 5
        %v319 = vsel %vm235, %v314, %v318
        %v321 = vshrl.u32 %v221, 16
        %v323 = vrot.slane %v321, 4
        %v324 = vshll.u32 %v221, 16
        %v326 = vrot.slane %v324, 5
        %v327 = vor.u32 %v323, %v326
        %v328 = vrot.slane %v327, 4
        %v330 = vshll.u32 %v231, 16
        %v332 = vrot.slane %v330, 5
        %v333 = vsel %vm235, %v328, %v332
        %v335 = vshrl.u32 %v222, 16
        %v337 = vrot.slane %v335, 4
        %v338 = vshll.u32 %v222, 16
        %v340 = vrot.slane %v338, 5
        %v341 = vor.u32 %v337, %v340
        %v342 = vrot.slane %v341, 4
        %v344 = vshll.u32 %v232, 16
        %v346 = vrot.slane %v344, 5
        %v347 = vsel %vm235, %v342, %v346
        %s348 = scalar_lea.vmem %s210, 8
        %v349 = vld [vmem:[%s348] sm:$0xf]
        %v350 = vld [vmem:[%s348 + $0x4] sm:$0xf]
        %v351 = vunpack.c.l.b16 %v249
        %v352 = vunpack.c.l.b16 %v263
        %v353 = vunpack.c.l.b16 %v277
        %v354 = vunpack.c.l.b16 %v291
        %v355 = vunpack.c.l.b16 %v305
        %v356 = vunpack.c.l.b16 %v319
        %v357 = vunpack.c.l.b16 %v333
        %v358 = vunpack.c.l.b16 %v347
        %v359 = vpack.c.b16 %v352, %v351
        %v360 = vpack.c.b16 %v354, %v353
        %v361 = vpack.c.b16 %v356, %v355
        %v362 = vpack.c.b16 %v358, %v357
        %v365 = vunpack.c.l.b16 %v349
        %v366 = vunpack.c.l.b16 %v350
        %v367 = vpack.c.b16 %v366, %v365
        %vm369 = vcmask 130048
        %v371 = vsel %vm369, %v359, 0
        %v374 = vsel %vm369, %v360, 0
        %v377 = vsel %vm369, %v361, 0
        %v380 = vsel %vm369, %v362, 0
        %382 = vmatprep.subr.bf16.mxu0 0
        %383 = vmatpush1.bf16.msra.mxu0 %v367
        %384 = vmatprep.subr.bf16.mxu0 0
        %385 = vmatpush1.bf16.msra.mxu0 0
        %386 = vmatprep.subr.bf16.mxu0 0
        %387 = vmatpush1.bf16.msra.mxu0 0
        %388 = vmatprep.subr.bf16.mxu0 0
        %389 = vmatpush1.bf16.msra.mxu0 0
        %390 = vmatprep.subr.bf16.mxu0 0
        %391 = vmatpush1.bf16.msra.mxu0 0
        %392 = vmatprep.subr.bf16.mxu0 0
        %393 = vmatpush1.bf16.msra.mxu0 0
        %394 = vmatprep.subr.bf16.mxu0 0
        %395 = vmatpush1.bf16.msra.mxu0 0
        %396 = vmatprep.subr.bf16.mxu0 0
        %397 = vmatpush1.bf16.msra.mxu0 0
        %398 = vmatprep.subr.bf16.mxu0 0
        %399 = vmatpush1.bf16.msra.mxu0 0
        %400 = vmatprep.subr.bf16.mxu0 0
        %401 = vmatpush1.bf16.msra.mxu0 0
        %402 = vmatprep.subr.bf16.mxu0 0
        %403 = vmatpush1.bf16.msra.mxu0 0
        %404 = vmatprep.subr.bf16.mxu0 0
        %405 = vmatpush1.bf16.msra.mxu0 0
        %406 = vmatprep.subr.bf16.mxu0 0
        %407 = vmatpush1.bf16.msra.mxu0 0
        %408 = vmatprep.subr.bf16.mxu0 0
        %409 = vmatpush1.bf16.msra.mxu0 0
        %410 = vmatprep.subr.bf16.mxu0 0
        %411 = vmatpush1.bf16.msra.mxu0 0
        %412 = vmatprep.subr.bf16.mxu0 0
        %413 = vmatpush1.bf16.msra.mxu0 0
        %414 = vmatprep.mubr.bf16.mxu0 0
        %415 = vmatmul.mubr.bf16.gmra.mrb[0].mxu0 %v371
        %v416 = vpop.f32.mrb[0].mxu0
        %v417 = vadd.f32 0.0, %v416
        %v418 = vpop.f32.mrb[0].mxu0
        %v419 = vpop.f32.mrb[0].mxu0
        %v420 = vadd.f32 0.0, %v419
        %v421 = vpop.f32.mrb[0].mxu0
        %422 = vmatprep.mubr.bf16.mxu0 0
        %423 = vmatmul.mubr.bf16.gmra.mrb[0].mxu0 %v374
        %v424 = vpop.f32.mrb[0].mxu0
        %v425 = vadd.f32 0.0, %v424
        %v426 = vpop.f32.mrb[0].mxu0
        %v427 = vpop.f32.mrb[0].mxu0
        %v428 = vadd.f32 0.0, %v427
        %v429 = vpop.f32.mrb[0].mxu0
        %430 = vmatprep.mubr.bf16.mxu0 0
        %431 = vmatmul.mubr.bf16.gmra.mrb[0].mxu0 %v377
        %v432 = vpop.f32.mrb[0].mxu0
        %v433 = vadd.f32 0.0, %v432
        %v434 = vpop.f32.mrb[0].mxu0
        %v435 = vpop.f32.mrb[0].mxu0
        %v436 = vadd.f32 0.0, %v435
        %v437 = vpop.f32.mrb[0].mxu0
        %438 = vmatprep.mubr.bf16.mxu0 0
        %439 = vmatmul.mubr.bf16.gmra.mrb[0].mxu0 %v380
        %v440 = vpop.f32.mrb[0].mxu0
        %v441 = vadd.f32 0.0, %v440
        %v442 = vpop.f32.mrb[0].mxu0
        %v443 = vpop.f32.mrb[0].mxu0
        %v444 = vadd.f32 0.0, %v443
        %v445 = vpop.f32.mrb[0].mxu0
        %446 = vdwg.mxu0
        %v455 = vunpack.c.l.b16 %v215
        %v456 = vunpack.c.l.b16 %v216
        %v457 = vunpack.c.l.b16 %v217
        %v458 = vunpack.c.l.b16 %v218
        %v459 = vunpack.c.l.b16 %v219
        %v460 = vunpack.c.l.b16 %v220
        %v461 = vunpack.c.l.b16 %v221
        %v462 = vunpack.c.l.b16 %v222
        %v463 = vpack.c.b16 %v456, %v455
        %v464 = vpack.c.b16 %v458, %v457
        %v465 = vpack.c.b16 %v460, %v459
        %v466 = vpack.c.b16 %v462, %v461
        %v469 = vunpack.c.l.b16 %v223
        %v470 = vunpack.c.l.b16 %v224
        %v471 = vpack.c.b16 %v470, %v469
        %v474 = vsel %vm369, %v463, 0
        %v477 = vsel %vm369, %v464, 0
        %v480 = vsel %vm369, %v465, 0
        %v483 = vsel %vm369, %v466, 0
        %485 = vmatprep.subr.bf16.mxu0 0
        %486 = vmatpush1.bf16.msra.mxu0 %v471
        %487 = vmatprep.subr.bf16.mxu0 0
        %488 = vmatpush1.bf16.msra.mxu0 0
        %489 = vmatprep.subr.bf16.mxu0 0
        %490 = vmatpush1.bf16.msra.mxu0 0
        %491 = vmatprep.subr.bf16.mxu0 0
        %492 = vmatpush1.bf16.msra.mxu0 0
        %493 = vmatprep.subr.bf16.mxu0 0
        %494 = vmatpush1.bf16.msra.mxu0 0
        %495 = vmatprep.subr.bf16.mxu0 0
        %496 = vmatpush1.bf16.msra.mxu0 0
        %497 = vmatprep.subr.bf16.mxu0 0
        %498 = vmatpush1.bf16.msra.mxu0 0
        %499 = vmatprep.subr.bf16.mxu0 0
        %500 = vmatpush1.bf16.msra.mxu0 0
        %501 = vmatprep.subr.bf16.mxu0 0
        %502 = vmatpush1.bf16.msra.mxu0 0
        %503 = vmatprep.subr.bf16.mxu0 0
        %504 = vmatpush1.bf16.msra.mxu0 0
        %505 = vmatprep.subr.bf16.mxu0 0
        %506 = vmatpush1.bf16.msra.mxu0 0
        %507 = vmatprep.subr.bf16.mxu0 0
        %508 = vmatpush1.bf16.msra.mxu0 0
        %509 = vmatprep.subr.bf16.mxu0 0
        %510 = vmatpush1.bf16.msra.mxu0 0
        %511 = vmatprep.subr.bf16.mxu0 0
        %512 = vmatpush1.bf16.msra.mxu0 0
        %513 = vmatprep.subr.bf16.mxu0 0
        %514 = vmatpush1.bf16.msra.mxu0 0
        %515 = vmatprep.subr.bf16.mxu0 0
        %516 = vmatpush1.bf16.msra.mxu0 0
        %517 = vmatprep.mubr.bf16.mxu0 0
        %518 = vmatmul.mubr.bf16.gmra.mrb[0].mxu0 %v474
        %v519 = vpop.f32.mrb[0].mxu0
        %v520 = vadd.f32 %v417, %v519
        %v521 = vpop.f32.mrb[0].mxu0
        %v522 = vpop.f32.mrb[0].mxu0
        %v523 = vadd.f32 %v420, %v522
        %v524 = vpop.f32.mrb[0].mxu0
        %525 = vmatprep.mubr.bf16.mxu0 0
        %526 = vmatmul.mubr.bf16.gmra.mrb[0].mxu0 %v477
        %v527 = vpop.f32.mrb[0].mxu0
        %v528 = vadd.f32 %v425, %v527
        %v529 = vpop.f32.mrb[0].mxu0
        %v530 = vpop.f32.mrb[0].mxu0
        %v531 = vadd.f32 %v428, %v530
        %v532 = vpop.f32.mrb[0].mxu0
        %533 = vmatprep.mubr.bf16.mxu0 0
        %534 = vmatmul.mubr.bf16.gmra.mrb[0].mxu0 %v480
        %v535 = vpop.f32.mrb[0].mxu0
        %v536 = vadd.f32 %v433, %v535
        %v537 = vpop.f32.mrb[0].mxu0
        %v538 = vpop.f32.mrb[0].mxu0
        %v539 = vadd.f32 %v436, %v538
        %v540 = vpop.f32.mrb[0].mxu0
        %541 = vmatprep.mubr.bf16.mxu0 0
        %542 = vmatmul.mubr.bf16.gmra.mrb[0].mxu0 %v483
        %v543 = vpop.f32.mrb[0].mxu0
        %v544 = vadd.f32 %v441, %v543
        %v545 = vpop.f32.mrb[0].mxu0
        %v546 = vpop.f32.mrb[0].mxu0
        %v547 = vadd.f32 %v444, %v546
        %v548 = vpop.f32.mrb[0].mxu0
        %549 = vdwg.mxu0
        %v550 = vld [vmem:[%s206] sm:$0xe]
        %v551 = vld [vmem:[%s206 + $0x8] sm:$0xe]
        %v552 = vld [vmem:[%s206 + $0x10] sm:$0xe]
        %v553 = vld [vmem:[%s206 + $0x18] sm:$0xe]
        %v554 = vld [vmem:[%s206 + $0x20] sm:$0xe]
        %v555 = vld [vmem:[%s206 + $0x28] sm:$0xe]
        %v556 = vld [vmem:[%s206 + $0x30] sm:$0xe]
        %v557 = vld [vmem:[%s206 + $0x38] sm:$0xe]
        %vm574 = vcmask 1042432
        %vm575 = vcmask 1046532
        %vm576 = vmor %vm574, %vm575
        %v577 = vrot.slane %v550, 5
        %v578 = vrot.slane %v577, 4
        %v579 = vrot.slane %v225, 5
        %v580 = vsel %vm576, %v578, %v579
        %v581 = vrot.slane %v551, 5
        %v582 = vrot.slane %v581, 4
        %v583 = vrot.slane %v226, 5
        %v584 = vsel %vm576, %v582, %v583
        %v585 = vrot.slane %v552, 5
        %v586 = vrot.slane %v585, 4
        %v587 = vrot.slane %v227, 5
        %v588 = vsel %vm576, %v586, %v587
        %v589 = vrot.slane %v553, 5
        %v590 = vrot.slane %v589, 4
        %v591 = vrot.slane %v228, 5
        %v592 = vsel %vm576, %v590, %v591
        %v593 = vrot.slane %v554, 5
        %v594 = vrot.slane %v593, 4
        %v595 = vrot.slane %v229, 5
        %v596 = vsel %vm576, %v594, %v595
        %v597 = vrot.slane %v555, 5
        %v598 = vrot.slane %v597, 4
        %v599 = vrot.slane %v230, 5
        %v600 = vsel %vm576, %v598, %v599
        %v601 = vrot.slane %v556, 5
        %v602 = vrot.slane %v601, 4
        %v603 = vrot.slane %v231, 5
        %v604 = vsel %vm576, %v602, %v603
        %v605 = vrot.slane %v557, 5
        %v606 = vrot.slane %v605, 4
        %v607 = vrot.slane %v232, 5
        %v608 = vsel %vm576, %v606, %v607
        %s609 = scalar_lea.vmem %s210, 16
        %v610 = vld [vmem:[%s609] sm:$0xf]
        %v611 = vld [vmem:[%s609 + $0x4] sm:$0xf]
        %v612 = vunpack.c.l.b16 %v580
        %v613 = vunpack.c.l.b16 %v584
        %v614 = vunpack.c.l.b16 %v588
        %v615 = vunpack.c.l.b16 %v592
        %v616 = vunpack.c.l.b16 %v596
        %v617 = vunpack.c.l.b16 %v600
        %v618 = vunpack.c.l.b16 %v604
        %v619 = vunpack.c.l.b16 %v608
        %v620 = vpack.c.b16 %v613, %v612
        %v621 = vpack.c.b16 %v615, %v614
        %v622 = vpack.c.b16 %v617, %v616
        %v623 = vpack.c.b16 %v619, %v618
        %v626 = vunpack.c.l.b16 %v610
        %v627 = vunpack.c.l.b16 %v611
        %v628 = vpack.c.b16 %v627, %v626
        %v631 = vsel %vm369, %v620, 0
        %v634 = vsel %vm369, %v621, 0
        %v637 = vsel %vm369, %v622, 0
        %v640 = vsel %vm369, %v623, 0
        %642 = vmatprep.subr.bf16.mxu0 0
        %643 = vmatpush1.bf16.msra.mxu0 %v628
        %644 = vmatprep.subr.bf16.mxu0 0
        %645 = vmatpush1.bf16.msra.mxu0 0
        %646 = vmatprep.subr.bf16.mxu0 0
        %647 = vmatpush1.bf16.msra.mxu0 0
        %648 = vmatprep.subr.bf16.mxu0 0
        %649 = vmatpush1.bf16.msra.mxu0 0
        %650 = vmatprep.subr.bf16.mxu0 0
        %651 = vmatpush1.bf16.msra.mxu0 0
        %652 = vmatprep.subr.bf16.mxu0 0
        %653 = vmatpush1.bf16.msra.mxu0 0
        %654 = vmatprep.subr.bf16.mxu0 0
        %655 = vmatpush1.bf16.msra.mxu0 0
        %656 = vmatprep.subr.bf16.mxu0 0
        %657 = vmatpush1.bf16.msra.mxu0 0
        %658 = vmatprep.subr.bf16.mxu0 0
        %659 = vmatpush1.bf16.msra.mxu0 0
        %660 = vmatprep.subr.bf16.mxu0 0
        %661 = vmatpush1.bf16.msra.mxu0 0
        %662 = vmatprep.subr.bf16.mxu0 0
        %663 = vmatpush1.bf16.msra.mxu0 0
        %664 = vmatprep.subr.bf16.mxu0 0
        %665 = vmatpush1.bf16.msra.mxu0 0
        %666 = vmatprep.subr.bf16.mxu0 0
        %667 = vmatpush1.bf16.msra.mxu0 0
        %668 = vmatprep.subr.bf16.mxu0 0
        %669 = vmatpush1.bf16.msra.mxu0 0
        %670 = vmatprep.subr.bf16.mxu0 0
        %671 = vmatpush1.bf16.msra.mxu0 0
        %672 = vmatprep.subr.bf16.mxu0 0
        %673 = vmatpush1.bf16.msra.mxu0 0
        %674 = vmatprep.mubr.bf16.mxu0 0
        %675 = vmatmul.mubr.bf16.gmra.mrb[0].mxu0 %v631
        %v676 = vpop.f32.mrb[0].mxu0
        %v677 = vadd.f32 0.0, %v676
        %v678 = vpop.f32.mrb[0].mxu0
        %v679 = vpop.f32.mrb[0].mxu0
        %v680 = vadd.f32 0.0, %v679
        %v681 = vpop.f32.mrb[0].mxu0
        %682 = vmatprep.mubr.bf16.mxu0 0
        %683 = vmatmul.mubr.bf16.gmra.mrb[0].mxu0 %v634
        %v684 = vpop.f32.mrb[0].mxu0
        %v685 = vadd.f32 0.0, %v684
        %v686 = vpop.f32.mrb[0].mxu0
        %v687 = vpop.f32.mrb[0].mxu0
        %v688 = vadd.f32 0.0, %v687
        %v689 = vpop.f32.mrb[0].mxu0
        %690 = vmatprep.mubr.bf16.mxu0 0
        %691 = vmatmul.mubr.bf16.gmra.mrb[0].mxu0 %v637
        %v692 = vpop.f32.mrb[0].mxu0
        %v693 = vadd.f32 0.0, %v692
        %v694 = vpop.f32.mrb[0].mxu0
        %v695 = vpop.f32.mrb[0].mxu0
        %v696 = vadd.f32 0.0, %v695
        %v697 = vpop.f32.mrb[0].mxu0
        %698 = vmatprep.mubr.bf16.mxu0 0
        %699 = vmatmul.mubr.bf16.gmra.mrb[0].mxu0 %v640
        %v700 = vpop.f32.mrb[0].mxu0
        %v701 = vadd.f32 0.0, %v700
        %v702 = vpop.f32.mrb[0].mxu0
        %v703 = vpop.f32.mrb[0].mxu0
        %v704 = vadd.f32 0.0, %v703
        %v705 = vpop.f32.mrb[0].mxu0
        %706 = vdwg.mxu0
        %v707 = vadd.f32 %v520, %v677
        %v708 = vadd.f32 %v523, %v680
        %v709 = vadd.f32 %v528, %v685
        %v710 = vadd.f32 %v531, %v688
        %v711 = vadd.f32 %v536, %v693
        %v712 = vadd.f32 %v539, %v696
        %v713 = vadd.f32 %v544, %v701
        %v714 = vadd.f32 %v547, %v704
        %s715 = scalar_lea.vmem %s206, 8
        %v716 = vld [vmem:[%s715] sm:$0xf]
        %v717 = vld [vmem:[%s715 + $0x8] sm:$0xf]
        %v718 = vld [vmem:[%s715 + $0x10] sm:$0xf]
        %v719 = vld [vmem:[%s715 + $0x18] sm:$0xf]
        %v720 = vld [vmem:[%s715 + $0x20] sm:$0xf]
        %v721 = vld [vmem:[%s715 + $0x28] sm:$0xf]
        %v722 = vld [vmem:[%s715 + $0x30] sm:$0xf]
        %v723 = vld [vmem:[%s715 + $0x38] sm:$0xf]
        %s724 = scalar_lea.vmem %s210, 24
        %v725 = vld [vmem:[%s724] sm:$0xf]
        %v726 = vld [vmem:[%s724 + $0x4] sm:$0xf]
        %v735 = vunpack.c.l.b16 %v716
        %v736 = vunpack.c.l.b16 %v717
        %v737 = vunpack.c.l.b16 %v718
        %v738 = vunpack.c.l.b16 %v719
        %v739 = vunpack.c.l.b16 %v720
        %v740 = vunpack.c.l.b16 %v721
        %v741 = vunpack.c.l.b16 %v722
        %v742 = vunpack.c.l.b16 %v723
        %v743 = vpack.c.b16 %v736, %v735
        %v744 = vpack.c.b16 %v738, %v737
        %v745 = vpack.c.b16 %v740, %v739
        %v746 = vpack.c.b16 %v742, %v741
        %v749 = vunpack.c.l.b16 %v725
        %v750 = vunpack.c.l.b16 %v726
        %v751 = vpack.c.b16 %v750, %v749
        %v754 = vsel %vm369, %v743, 0
        %v757 = vsel %vm369, %v744, 0
        %v760 = vsel %vm369, %v745, 0
        %v763 = vsel %vm369, %v746, 0
        %765 = vmatprep.subr.bf16.mxu0 0
        %766 = vmatpush1.bf16.msra.mxu0 %v751
        %767 = vmatprep.subr.bf16.mxu0 0
        %768 = vmatpush1.bf16.msra.mxu0 0
        %769 = vmatprep.subr.bf16.mxu0 0
        %770 = vmatpush1.bf16.msra.mxu0 0
        %771 = vmatprep.subr.bf16.mxu0 0
        %772 = vmatpush1.bf16.msra.mxu0 0
        %773 = vmatprep.subr.bf16.mxu0 0
        %774 = vmatpush1.bf16.msra.mxu0 0
        %775 = vmatprep.subr.bf16.mxu0 0
        %776 = vmatpush1.bf16.msra.mxu0 0
        %777 = vmatprep.subr.bf16.mxu0 0
        %778 = vmatpush1.bf16.msra.mxu0 0
        %779 = vmatprep.subr.bf16.mxu0 0
        %780 = vmatpush1.bf16.msra.mxu0 0
        %781 = vmatprep.subr.bf16.mxu0 0
        %782 = vmatpush1.bf16.msra.mxu0 0
        %783 = vmatprep.subr.bf16.mxu0 0
        %784 = vmatpush1.bf16.msra.mxu0 0
        %785 = vmatprep.subr.bf16.mxu0 0
        %786 = vmatpush1.bf16.msra.mxu0 0
        %787 = vmatprep.subr.bf16.mxu0 0
        %788 = vmatpush1.bf16.msra.mxu0 0
        %789 = vmatprep.subr.bf16.mxu0 0
        %790 = vmatpush1.bf16.msra.mxu0 0
        %791 = vmatprep.subr.bf16.mxu0 0
        %792 = vmatpush1.bf16.msra.mxu0 0
        %793 = vmatprep.subr.bf16.mxu0 0
        %794 = vmatpush1.bf16.msra.mxu0 0
        %795 = vmatprep.subr.bf16.mxu0 0
        %796 = vmatpush1.bf16.msra.mxu0 0
        %797 = vmatprep.mubr.bf16.mxu0 0
        %798 = vmatmul.mubr.bf16.gmra.mrb[0].mxu0 %v754
        %v799 = vpop.f32.mrb[0].mxu0
        %v800 = vadd.f32 0.0, %v799
        %v801 = vpop.f32.mrb[0].mxu0
        %v802 = vpop.f32.mrb[0].mxu0
        %v803 = vadd.f32 0.0, %v802
        %v804 = vpop.f32.mrb[0].mxu0
        %805 = vmatprep.mubr.bf16.mxu0 0
        %806 = vmatmul.mubr.bf16.gmra.mrb[0].mxu0 %v757
        %v807 = vpop.f32.mrb[0].mxu0
        %v808 = vadd.f32 0.0, %v807
        %v809 = vpop.f32.mrb[0].mxu0
        %v810 = vpop.f32.mrb[0].mxu0
        %v811 = vadd.f32 0.0, %v810
        %v812 = vpop.f32.mrb[0].mxu0
        %813 = vmatprep.mubr.bf16.mxu0 0
        %814 = vmatmul.mubr.bf16.gmra.mrb[0].mxu0 %v760
        %v815 = vpop.f32.mrb[0].mxu0
        %v816 = vadd.f32 0.0, %v815
        %v817 = vpop.f32.mrb[0].mxu0
        %v818 = vpop.f32.mrb[0].mxu0
        %v819 = vadd.f32 0.0, %v818
        %v820 = vpop.f32.mrb[0].mxu0
        %821 = vmatprep.mubr.bf16.mxu0 0
        %822 = vmatmul.mubr.bf16.gmra.mrb[0].mxu0 %v763
        %v823 = vpop.f32.mrb[0].mxu0
        %v824 = vadd.f32 0.0, %v823
        %v825 = vpop.f32.mrb[0].mxu0
        %v826 = vpop.f32.mrb[0].mxu0
        %v827 = vadd.f32 0.0, %v826
        %v828 = vpop.f32.mrb[0].mxu0
        %829 = vdwg.mxu0
        %v830 = vadd.f32 %v707, %v800
        %v831 = vadd.f32 %v708, %v803
        %v832 = vadd.f32 %v709, %v808
        %v833 = vadd.f32 %v710, %v811
        %v834 = vadd.f32 %v711, %v816
        %v835 = vadd.f32 %v712, %v819
        %v836 = vadd.f32 %v713, %v824
        %v837 = vadd.f32 %v714, %v827
        %v838 = vld [vmem:[%s715] sm:$0xf]
        %v839 = vld [vmem:[%s715 + $0x4] sm:$0x1]
        %v840 = vld [vmem:[%s715 + $0x8] sm:$0xf]
        %v841 = vld [vmem:[%s715 + $0xc] sm:$0x1]
        %v842 = vld [vmem:[%s715 + $0x10] sm:$0xf]
        %v843 = vld [vmem:[%s715 + $0x14] sm:$0x1]
        %v844 = vld [vmem:[%s715 + $0x18] sm:$0xf]
        %v845 = vld [vmem:[%s715 + $0x1c] sm:$0x1]
        %v846 = vld [vmem:[%s715 + $0x20] sm:$0xf]
        %v847 = vld [vmem:[%s715 + $0x24] sm:$0x1]
        %v848 = vld [vmem:[%s715 + $0x28] sm:$0xf]
        %v849 = vld [vmem:[%s715 + $0x2c] sm:$0x1]
        %v850 = vld [vmem:[%s715 + $0x30] sm:$0xf]
        %v851 = vld [vmem:[%s715 + $0x34] sm:$0x1]
        %v852 = vld [vmem:[%s715 + $0x38] sm:$0xf]
        %v853 = vld [vmem:[%s715 + $0x3c] sm:$0x1]
        %v855 = vshrl.u32 %v838, 16
        %v857 = vrot.slane %v855, 4
        %v858 = vshll.u32 %v838, 16
        %v860 = vrot.slane %v858, 5
        %v861 = vor.u32 %v857, %v860
        %v862 = vrot.slane %v861, 4
        %v864 = vshll.u32 %v839, 16
        %v866 = vrot.slane %v864, 5
        %v867 = vsel %vm235, %v862, %v866
        %v869 = vshrl.u32 %v840, 16
        %v871 = vrot.slane %v869, 4
        %v872 = vshll.u32 %v840, 16
        %v874 = vrot.slane %v872, 5
        %v875 = vor.u32 %v871, %v874
        %v876 = vrot.slane %v875, 4
        %v878 = vshll.u32 %v841, 16
        %v880 = vrot.slane %v878, 5
        %v881 = vsel %vm235, %v876, %v880
        %v883 = vshrl.u32 %v842, 16
        %v885 = vrot.slane %v883, 4
        %v886 = vshll.u32 %v842, 16
        %v888 = vrot.slane %v886, 5
        %v889 = vor.u32 %v885, %v888
        %v890 = vrot.slane %v889, 4
        %v892 = vshll.u32 %v843, 16
        %v894 = vrot.slane %v892, 5
        %v895 = vsel %vm235, %v890, %v894
        %v897 = vshrl.u32 %v844, 16
        %v899 = vrot.slane %v897, 4
        %v900 = vshll.u32 %v844, 16
        %v902 = vrot.slane %v900, 5
        %v903 = vor.u32 %v899, %v902
        %v904 = vrot.slane %v903, 4
        %v906 = vshll.u32 %v845, 16
        %v908 = vrot.slane %v906, 5
        %v909 = vsel %vm235, %v904, %v908
        %v911 = vshrl.u32 %v846, 16
        %v913 = vrot.slane %v911, 4
        %v914 = vshll.u32 %v846, 16
        %v916 = vrot.slane %v914, 5
        %v917 = vor.u32 %v913, %v916
        %v918 = vrot.slane %v917, 4
        %v920 = vshll.u32 %v847, 16
        %v922 = vrot.slane %v920, 5
        %v923 = vsel %vm235, %v918, %v922
        %v925 = vshrl.u32 %v848, 16
        %v927 = vrot.slane %v925, 4
        %v928 = vshll.u32 %v848, 16
        %v930 = vrot.slane %v928, 5
        %v931 = vor.u32 %v927, %v930
        %v932 = vrot.slane %v931, 4
        %v934 = vshll.u32 %v849, 16
        %v936 = vrot.slane %v934, 5
        %v937 = vsel %vm235, %v932, %v936
        %v939 = vshrl.u32 %v850, 16
        %v941 = vrot.slane %v939, 4
        %v942 = vshll.u32 %v850, 16
        %v944 = vrot.slane %v942, 5
        %v945 = vor.u32 %v941, %v944
        %v946 = vrot.slane %v945, 4
        %v948 = vshll.u32 %v851, 16
        %v950 = vrot.slane %v948, 5
        %v951 = vsel %vm235, %v946, %v950
        %v953 = vshrl.u32 %v852, 16
        %v955 = vrot.slane %v953, 4
        %v956 = vshll.u32 %v852, 16
        %v958 = vrot.slane %v956, 5
        %v959 = vor.u32 %v955, %v958
        %v960 = vrot.slane %v959, 4
        %v962 = vshll.u32 %v853, 16
        %v964 = vrot.slane %v962, 5
        %v965 = vsel %vm235, %v960, %v964
        %s966 = scalar_lea.vmem %s210, 32
        %v967 = vld [vmem:[%s966] sm:$0xf]
        %v968 = vld [vmem:[%s966 + $0x4] sm:$0xf]
        %v969 = vunpack.c.l.b16 %v867
        %v970 = vunpack.c.l.b16 %v881
        %v971 = vunpack.c.l.b16 %v895
        %v972 = vunpack.c.l.b16 %v909
        %v973 = vunpack.c.l.b16 %v923
        %v974 = vunpack.c.l.b16 %v937
        %v975 = vunpack.c.l.b16 %v951
        %v976 = vunpack.c.l.b16 %v965
        %v977 = vpack.c.b16 %v970, %v969
        %v978 = vpack.c.b16 %v972, %v971
        %v979 = vpack.c.b16 %v974, %v973
        %v980 = vpack.c.b16 %v976, %v975
        %v983 = vunpack.c.l.b16 %v967
        %v984 = vunpack.c.l.b16 %v968
        %v985 = vpack.c.b16 %v984, %v983
        %v988 = vsel %vm369, %v977, 0
        %v991 = vsel %vm369, %v978, 0
        %v994 = vsel %vm369, %v979, 0
        %v997 = vsel %vm369, %v980, 0
        %999 = vmatprep.subr.bf16.mxu0 0
        %1000 = vmatpush1.bf16.msra.mxu0 %v985
        %1001 = vmatprep.subr.bf16.mxu0 0
        %1002 = vmatpush1.bf16.msra.mxu0 0
        %1003 = vmatprep.subr.bf16.mxu0 0
        %1004 = vmatpush1.bf16.msra.mxu0 0
        %1005 = vmatprep.subr.bf16.mxu0 0
        %1006 = vmatpush1.bf16.msra.mxu0 0
        %1007 = vmatprep.subr.bf16.mxu0 0
        %1008 = vmatpush1.bf16.msra.mxu0 0
        %1009 = vmatprep.subr.bf16.mxu0 0
        %1010 = vmatpush1.bf16.msra.mxu0 0
        %1011 = vmatprep.subr.bf16.mxu0 0
        %1012 = vmatpush1.bf16.msra.mxu0 0
        %1013 = vmatprep.subr.bf16.mxu0 0
        %1014 = vmatpush1.bf16.msra.mxu0 0
        %1015 = vmatprep.subr.bf16.mxu0 0
        %1016 = vmatpush1.bf16.msra.mxu0 0
        %1017 = vmatprep.subr.bf16.mxu0 0
        %1018 = vmatpush1.bf16.msra.mxu0 0
        %1019 = vmatprep.subr.bf16.mxu0 0
        %1020 = vmatpush1.bf16.msra.mxu0 0
        %1021 = vmatprep.subr.bf16.mxu0 0
        %1022 = vmatpush1.bf16.msra.mxu0 0
        %1023 = vmatprep.subr.bf16.mxu0 0
        %1024 = vmatpush1.bf16.msra.mxu0 0
        %1025 = vmatprep.subr.bf16.mxu0 0
        %1026 = vmatpush1.bf16.msra.mxu0 0
        %1027 = vmatprep.subr.bf16.mxu0 0
        %1028 = vmatpush1.bf16.msra.mxu0 0
        %1029 = vmatprep.subr.bf16.mxu0 0
        %1030 = vmatpush1.bf16.msra.mxu0 0
        %1031 = vmatprep.mubr.bf16.mxu0 0
        %1032 = vmatmul.mubr.bf16.gmra.mrb[0].mxu0 %v988
        %v1033 = vpop.f32.mrb[0].mxu0
        %v1034 = vadd.f32 0.0, %v1033
        %v1035 = vpop.f32.mrb[0].mxu0
        %v1036 = vpop.f32.mrb[0].mxu0
        %v1037 = vadd.f32 0.0, %v1036
        %v1038 = vpop.f32.mrb[0].mxu0
        %1039 = vmatprep.mubr.bf16.mxu0 0
        %1040 = vmatmul.mubr.bf16.gmra.mrb[0].mxu0 %v991
        %v1041 = vpop.f32.mrb[0].mxu0
        %v1042 = vadd.f32 0.0, %v1041
        %v1043 = vpop.f32.mrb[0].mxu0
        %v1044 = vpop.f32.mrb[0].mxu0
        %v1045 = vadd.f32 0.0, %v1044
        %v1046 = vpop.f32.mrb[0].mxu0
        %1047 = vmatprep.mubr.bf16.mxu0 0
        %1048 = vmatmul.mubr.bf16.gmra.mrb[0].mxu0 %v994
        %v1049 = vpop.f32.mrb[0].mxu0
        %v1050 = vadd.f32 0.0, %v1049
        %v1051 = vpop.f32.mrb[0].mxu0
        %v1052 = vpop.f32.mrb[0].mxu0
        %v1053 = vadd.f32 0.0, %v1052
        %v1054 = vpop.f32.mrb[0].mxu0
        %1055 = vmatprep.mubr.bf16.mxu0 0
        %1056 = vmatmul.mubr.bf16.gmra.mrb[0].mxu0 %v997
        %v1057 = vpop.f32.mrb[0].mxu0
        %v1058 = vadd.f32 0.0, %v1057
        %v1059 = vpop.f32.mrb[0].mxu0
        %v1060 = vpop.f32.mrb[0].mxu0
        %v1061 = vadd.f32 0.0, %v1060
        %v1062 = vpop.f32.mrb[0].mxu0
        %1063 = vdwg.mxu0
        %v1064 = vadd.f32 %v830, %v1034
        %v1065 = vadd.f32 %v831, %v1037
        %v1066 = vadd.f32 %v832, %v1042
        %v1067 = vadd.f32 %v833, %v1045
        %v1068 = vadd.f32 %v834, %v1050
        %v1069 = vadd.f32 %v835, %v1053
        %v1070 = vadd.f32 %v836, %v1058
        %v1071 = vadd.f32 %v837, %v1061
        %v1072 = vld [vmem:[%s715] sm:$0xe]
        %v1073 = vld [vmem:[%s715 + $0x8] sm:$0xe]
        %v1074 = vld [vmem:[%s715 + $0x10] sm:$0xe]
        %v1075 = vld [vmem:[%s715 + $0x18] sm:$0xe]
        %v1076 = vld [vmem:[%s715 + $0x20] sm:$0xe]
        %v1077 = vld [vmem:[%s715 + $0x28] sm:$0xe]
        %v1078 = vld [vmem:[%s715 + $0x30] sm:$0xe]
        %v1079 = vld [vmem:[%s715 + $0x38] sm:$0xe]
        %v1096 = vrot.slane %v1072, 5
        %v1097 = vrot.slane %v1096, 4
        %v1098 = vrot.slane %v839, 5
        %v1099 = vsel %vm576, %v1097, %v1098
        %v1100 = vrot.slane %v1073, 5
        %v1101 = vrot.slane %v1100, 4
        %v1102 = vrot.slane %v841, 5
        %v1103 = vsel %vm576, %v1101, %v1102
        %v1104 = vrot.slane %v1074, 5
        %v1105 = vrot.slane %v1104, 4
        %v1106 = vrot.slane %v843, 5
        %v1107 = vsel %vm576, %v1105, %v1106
        %v1108 = vrot.slane %v1075, 5
        %v1109 = vrot.slane %v1108, 4
        %v1110 = vrot.slane %v845, 5
        %v1111 = vsel %vm576, %v1109, %v1110
        %v1112 = vrot.slane %v1076, 5
        %v1113 = vrot.slane %v1112, 4
        %v1114 = vrot.slane %v847, 5
        %v1115 = vsel %vm576, %v1113, %v1114
        %v1116 = vrot.slane %v1077, 5
        %v1117 = vrot.slane %v1116, 4
        %v1118 = vrot.slane %v849, 5
        %v1119 = vsel %vm576, %v1117, %v1118
        %v1120 = vrot.slane %v1078, 5
        %v1121 = vrot.slane %v1120, 4
        %v1122 = vrot.slane %v851, 5
        %v1123 = vsel %vm576, %v1121, %v1122
        %v1124 = vrot.slane %v1079, 5
        %v1125 = vrot.slane %v1124, 4
        %v1126 = vrot.slane %v853, 5
        %v1127 = vsel %vm576, %v1125, %v1126
        %s1128 = scalar_lea.vmem %s210, 40
        %v1129 = vld [vmem:[%s1128] sm:$0xf]
        %v1130 = vld [vmem:[%s1128 + $0x4] sm:$0xf]
        %v1131 = vunpack.c.l.b16 %v1099
        %v1132 = vunpack.c.l.b16 %v1103
        %v1133 = vunpack.c.l.b16 %v1107
        %v1134 = vunpack.c.l.b16 %v1111
        %v1135 = vunpack.c.l.b16 %v1115
        %v1136 = vunpack.c.l.b16 %v1119
        %v1137 = vunpack.c.l.b16 %v1123
        %v1138 = vunpack.c.l.b16 %v1127
        %v1139 = vpack.c.b16 %v1132, %v1131
        %v1140 = vpack.c.b16 %v1134, %v1133
        %v1141 = vpack.c.b16 %v1136, %v1135
        %v1142 = vpack.c.b16 %v1138, %v1137
        %v1145 = vunpack.c.l.b16 %v1129
        %v1146 = vunpack.c.l.b16 %v1130
        %v1147 = vpack.c.b16 %v1146, %v1145
        %v1150 = vsel %vm369, %v1139, 0
        %v1153 = vsel %vm369, %v1140, 0
        %v1156 = vsel %vm369, %v1141, 0
        %v1159 = vsel %vm369, %v1142, 0
        %1161 = vmatprep.subr.bf16.mxu0 0
        %1162 = vmatpush1.bf16.msra.mxu0 %v1147
        %1163 = vmatprep.subr.bf16.mxu0 0
        %1164 = vmatpush1.bf16.msra.mxu0 0
        %1165 = vmatprep.subr.bf16.mxu0 0
        %1166 = vmatpush1.bf16.msra.mxu0 0
        %1167 = vmatprep.subr.bf16.mxu0 0
        %1168 = vmatpush1.bf16.msra.mxu0 0
        %1169 = vmatprep.subr.bf16.mxu0 0
        %1170 = vmatpush1.bf16.msra.mxu0 0
        %1171 = vmatprep.subr.bf16.mxu0 0
        %1172 = vmatpush1.bf16.msra.mxu0 0
        %1173 = vmatprep.subr.bf16.mxu0 0
        %1174 = vmatpush1.bf16.msra.mxu0 0
        %1175 = vmatprep.subr.bf16.mxu0 0
        %1176 = vmatpush1.bf16.msra.mxu0 0
        %1177 = vmatprep.subr.bf16.mxu0 0
        %1178 = vmatpush1.bf16.msra.mxu0 0
        %1179 = vmatprep.subr.bf16.mxu0 0
        %1180 = vmatpush1.bf16.msra.mxu0 0
        %1181 = vmatprep.subr.bf16.mxu0 0
        %1182 = vmatpush1.bf16.msra.mxu0 0
        %1183 = vmatprep.subr.bf16.mxu0 0
        %1184 = vmatpush1.bf16.msra.mxu0 0
        %1185 = vmatprep.subr.bf16.mxu0 0
        %1186 = vmatpush1.bf16.msra.mxu0 0
        %1187 = vmatprep.subr.bf16.mxu0 0
        %1188 = vmatpush1.bf16.msra.mxu0 0
        %1189 = vmatprep.subr.bf16.mxu0 0
        %1190 = vmatpush1.bf16.msra.mxu0 0
        %1191 = vmatprep.subr.bf16.mxu0 0
        %1192 = vmatpush1.bf16.msra.mxu0 0
        %1193 = vmatprep.mubr.bf16.mxu0 0
        %1194 = vmatmul.mubr.bf16.gmra.mrb[0].mxu0 %v1150
        %v1195 = vpop.f32.mrb[0].mxu0
        %v1196 = vadd.f32 0.0, %v1195
        %v1197 = vpop.f32.mrb[0].mxu0
        %v1198 = vpop.f32.mrb[0].mxu0
        %v1199 = vadd.f32 0.0, %v1198
        %v1200 = vpop.f32.mrb[0].mxu0
        %1201 = vmatprep.mubr.bf16.mxu0 0
        %1202 = vmatmul.mubr.bf16.gmra.mrb[0].mxu0 %v1153
        %v1203 = vpop.f32.mrb[0].mxu0
        %v1204 = vadd.f32 0.0, %v1203
        %v1205 = vpop.f32.mrb[0].mxu0
        %v1206 = vpop.f32.mrb[0].mxu0
        %v1207 = vadd.f32 0.0, %v1206
        %v1208 = vpop.f32.mrb[0].mxu0
        %1209 = vmatprep.mubr.bf16.mxu0 0
        %1210 = vmatmul.mubr.bf16.gmra.mrb[0].mxu0 %v1156
        %v1211 = vpop.f32.mrb[0].mxu0
        %v1212 = vadd.f32 0.0, %v1211
        %v1213 = vpop.f32.mrb[0].mxu0
        %v1214 = vpop.f32.mrb[0].mxu0
        %v1215 = vadd.f32 0.0, %v1214
        %v1216 = vpop.f32.mrb[0].mxu0
        %1217 = vmatprep.mubr.bf16.mxu0 0
        %1218 = vmatmul.mubr.bf16.gmra.mrb[0].mxu0 %v1159
        %v1219 = vpop.f32.mrb[0].mxu0
        %v1220 = vadd.f32 0.0, %v1219
        %v1221 = vpop.f32.mrb[0].mxu0
        %v1222 = vpop.f32.mrb[0].mxu0
        %v1223 = vadd.f32 0.0, %v1222
        %v1224 = vpop.f32.mrb[0].mxu0
        %1225 = vdwg.mxu0
        %v1226 = vadd.f32 %v1064, %v1196
        %v1227 = vadd.f32 %v1065, %v1199
        %v1228 = vadd.f32 %v1066, %v1204
        %v1229 = vadd.f32 %v1067, %v1207
        %v1230 = vadd.f32 %v1068, %v1212
        %v1231 = vadd.f32 %v1069, %v1215
        %v1232 = vadd.f32 %v1070, %v1220
        %v1233 = vadd.f32 %v1071, %v1223
        %s1234 = scalar_lea.vmem %s206, 16
        %v1235 = vld [vmem:[%s1234] sm:$0xf]
        %v1236 = vld [vmem:[%s1234 + $0x8] sm:$0xf]
        %v1237 = vld [vmem:[%s1234 + $0x10] sm:$0xf]
        %v1238 = vld [vmem:[%s1234 + $0x18] sm:$0xf]
        %v1239 = vld [vmem:[%s1234 + $0x20] sm:$0xf]
        %v1240 = vld [vmem:[%s1234 + $0x28] sm:$0xf]
        %v1241 = vld [vmem:[%s1234 + $0x30] sm:$0xf]
        %v1242 = vld [vmem:[%s1234 + $0x38] sm:$0xf]
        %s1243 = scalar_lea.vmem %s210, 48
        %v1244 = vld [vmem:[%s1243] sm:$0xf]
        %v1245 = vld [vmem:[%s1243 + $0x4] sm:$0xf]
        %v1254 = vunpack.c.l.b16 %v1235
        %v1255 = vunpack.c.l.b16 %v1236
        %v1256 = vunpack.c.l.b16 %v1237
        %v1257 = vunpack.c.l.b16 %v1238
        %v1258 = vunpack.c.l.b16 %v1239
        %v1259 = vunpack.c.l.b16 %v1240
        %v1260 = vunpack.c.l.b16 %v1241
        %v1261 = vunpack.c.l.b16 %v1242
        %v1262 = vpack.c.b16 %v1255, %v1254
        %v1263 = vpack.c.b16 %v1257, %v1256
        %v1264 = vpack.c.b16 %v1259, %v1258
        %v1265 = vpack.c.b16 %v1261, %v1260
        %v1268 = vunpack.c.l.b16 %v1244
        %v1269 = vunpack.c.l.b16 %v1245
        %v1270 = vpack.c.b16 %v1269, %v1268
        %v1273 = vsel %vm369, %v1262, 0
        %v1276 = vsel %vm369, %v1263, 0
        %v1279 = vsel %vm369, %v1264, 0
        %v1282 = vsel %vm369, %v1265, 0
        %1284 = vmatprep.subr.bf16.mxu0 0
        %1285 = vmatpush1.bf16.msra.mxu0 %v1270
        %1286 = vmatprep.subr.bf16.mxu0 0
        %1287 = vmatpush1.bf16.msra.mxu0 0
        %1288 = vmatprep.subr.bf16.mxu0 0
        %1289 = vmatpush1.bf16.msra.mxu0 0
        %1290 = vmatprep.subr.bf16.mxu0 0
        %1291 = vmatpush1.bf16.msra.mxu0 0
        %1292 = vmatprep.subr.bf16.mxu0 0
        %1293 = vmatpush1.bf16.msra.mxu0 0
        %1294 = vmatprep.subr.bf16.mxu0 0
        %1295 = vmatpush1.bf16.msra.mxu0 0
        %1296 = vmatprep.subr.bf16.mxu0 0
        %1297 = vmatpush1.bf16.msra.mxu0 0
        %1298 = vmatprep.subr.bf16.mxu0 0
        %1299 = vmatpush1.bf16.msra.mxu0 0
        %1300 = vmatprep.subr.bf16.mxu0 0
        %1301 = vmatpush1.bf16.msra.mxu0 0
        %1302 = vmatprep.subr.bf16.mxu0 0
        %1303 = vmatpush1.bf16.msra.mxu0 0
        %1304 = vmatprep.subr.bf16.mxu0 0
        %1305 = vmatpush1.bf16.msra.mxu0 0
        %1306 = vmatprep.subr.bf16.mxu0 0
        %1307 = vmatpush1.bf16.msra.mxu0 0
        %1308 = vmatprep.subr.bf16.mxu0 0
        %1309 = vmatpush1.bf16.msra.mxu0 0
        %1310 = vmatprep.subr.bf16.mxu0 0
        %1311 = vmatpush1.bf16.msra.mxu0 0
        %1312 = vmatprep.subr.bf16.mxu0 0
        %1313 = vmatpush1.bf16.msra.mxu0 0
        %1314 = vmatprep.subr.bf16.mxu0 0
        %1315 = vmatpush1.bf16.msra.mxu0 0
        %1316 = vmatprep.mubr.bf16.mxu0 0
        %1317 = vmatmul.mubr.bf16.gmra.mrb[0].mxu0 %v1273
        %v1318 = vpop.f32.mrb[0].mxu0
        %v1319 = vadd.f32 0.0, %v1318
        %v1320 = vpop.f32.mrb[0].mxu0
        %v1321 = vpop.f32.mrb[0].mxu0
        %v1322 = vadd.f32 0.0, %v1321
        %v1323 = vpop.f32.mrb[0].mxu0
        %1324 = vmatprep.mubr.bf16.mxu0 0
        %1325 = vmatmul.mubr.bf16.gmra.mrb[0].mxu0 %v1276
        %v1326 = vpop.f32.mrb[0].mxu0
        %v1327 = vadd.f32 0.0, %v1326
        %v1328 = vpop.f32.mrb[0].mxu0
        %v1329 = vpop.f32.mrb[0].mxu0
        %v1330 = vadd.f32 0.0, %v1329
        %v1331 = vpop.f32.mrb[0].mxu0
        %1332 = vmatprep.mubr.bf16.mxu0 0
        %1333 = vmatmul.mubr.bf16.gmra.mrb[0].mxu0 %v1279
        %v1334 = vpop.f32.mrb[0].mxu0
        %v1335 = vadd.f32 0.0, %v1334
        %v1336 = vpop.f32.mrb[0].mxu0
        %v1337 = vpop.f32.mrb[0].mxu0
        %v1338 = vadd.f32 0.0, %v1337
        %v1339 = vpop.f32.mrb[0].mxu0
        %1340 = vmatprep.mubr.bf16.mxu0 0
        %1341 = vmatmul.mubr.bf16.gmra.mrb[0].mxu0 %v1282
        %v1342 = vpop.f32.mrb[0].mxu0
        %v1343 = vadd.f32 0.0, %v1342
        %v1344 = vpop.f32.mrb[0].mxu0
        %v1345 = vpop.f32.mrb[0].mxu0
        %v1346 = vadd.f32 0.0, %v1345
        %v1347 = vpop.f32.mrb[0].mxu0
        %1348 = vdwg.mxu0
        %v1349 = vadd.f32 %v1226, %v1319
        %v1350 = vadd.f32 %v1227, %v1322
        %v1351 = vadd.f32 %v1228, %v1327
        %v1352 = vadd.f32 %v1229, %v1330
        %v1353 = vadd.f32 %v1230, %v1335
        %v1354 = vadd.f32 %v1231, %v1338
        %v1355 = vadd.f32 %v1232, %v1343
        %v1356 = vadd.f32 %v1233, %v1346
        %v1357 = vld [vmem:[%s1234] sm:$0xf]
        %v1358 = vld [vmem:[%s1234 + $0x4] sm:$0x1]
        %v1359 = vld [vmem:[%s1234 + $0x8] sm:$0xf]
        %v1360 = vld [vmem:[%s1234 + $0xc] sm:$0x1]
        %v1361 = vld [vmem:[%s1234 + $0x10] sm:$0xf]
        %v1362 = vld [vmem:[%s1234 + $0x14] sm:$0x1]
        %v1363 = vld [vmem:[%s1234 + $0x18] sm:$0xf]
        %v1364 = vld [vmem:[%s1234 + $0x1c] sm:$0x1]
        %v1365 = vld [vmem:[%s1234 + $0x20] sm:$0xf]
        %v1366 = vld [vmem:[%s1234 + $0x24] sm:$0x1]
        %v1367 = vld [vmem:[%s1234 + $0x28] sm:$0xf]
        %v1368 = vld [vmem:[%s1234 + $0x2c] sm:$0x1]
        %v1369 = vld [vmem:[%s1234 + $0x30] sm:$0xf]
        %v1370 = vld [vmem:[%s1234 + $0x34] sm:$0x1]
        %v1371 = vld [vmem:[%s1234 + $0x38] sm:$0xf]
        %v1372 = vld [vmem:[%s1234 + $0x3c] sm:$0x1]
        %v1374 = vshrl.u32 %v1357, 16
        %v1376 = vrot.slane %v1374, 4
        %v1377 = vshll.u32 %v1357, 16
        %v1379 = vrot.slane %v1377, 5
        %v1380 = vor.u32 %v1376, %v1379
        %v1381 = vrot.slane %v1380, 4
        %v1383 = vshll.u32 %v1358, 16
        %v1385 = vrot.slane %v1383, 5
        %v1386 = vsel %vm235, %v1381, %v1385
        %v1388 = vshrl.u32 %v1359, 16
        %v1390 = vrot.slane %v1388, 4
        %v1391 = vshll.u32 %v1359, 16
        %v1393 = vrot.slane %v1391, 5
        %v1394 = vor.u32 %v1390, %v1393
        %v1395 = vrot.slane %v1394, 4
        %v1397 = vshll.u32 %v1360, 16
        %v1399 = vrot.slane %v1397, 5
        %v1400 = vsel %vm235, %v1395, %v1399
        %v1402 = vshrl.u32 %v1361, 16
        %v1404 = vrot.slane %v1402, 4
        %v1405 = vshll.u32 %v1361, 16
        %v1407 = vrot.slane %v1405, 5
        %v1408 = vor.u32 %v1404, %v1407
        %v1409 = vrot.slane %v1408, 4
        %v1411 = vshll.u32 %v1362, 16
        %v1413 = vrot.slane %v1411, 5
        %v1414 = vsel %vm235, %v1409, %v1413
        %v1416 = vshrl.u32 %v1363, 16
        %v1418 = vrot.slane %v1416, 4
        %v1419 = vshll.u32 %v1363, 16
        %v1421 = vrot.slane %v1419, 5
        %v1422 = vor.u32 %v1418, %v1421
        %v1423 = vrot.slane %v1422, 4
        %v1425 = vshll.u32 %v1364, 16
        %v1427 = vrot.slane %v1425, 5
        %v1428 = vsel %vm235, %v1423, %v1427
        %v1430 = vshrl.u32 %v1365, 16
        %v1432 = vrot.slane %v1430, 4
        %v1433 = vshll.u32 %v1365, 16
        %v1435 = vrot.slane %v1433, 5
        %v1436 = vor.u32 %v1432, %v1435
        %v1437 = vrot.slane %v1436, 4
        %v1439 = vshll.u32 %v1366, 16
        %v1441 = vrot.slane %v1439, 5
        %v1442 = vsel %vm235, %v1437, %v1441
        %v1444 = vshrl.u32 %v1367, 16
        %v1446 = vrot.slane %v1444, 4
        %v1447 = vshll.u32 %v1367, 16
        %v1449 = vrot.slane %v1447, 5
        %v1450 = vor.u32 %v1446, %v1449
        %v1451 = vrot.slane %v1450, 4
        %v1453 = vshll.u32 %v1368, 16
        %v1455 = vrot.slane %v1453, 5
        %v1456 = vsel %vm235, %v1451, %v1455
        %v1458 = vshrl.u32 %v1369, 16
        %v1460 = vrot.slane %v1458, 4
        %v1461 = vshll.u32 %v1369, 16
        %v1463 = vrot.slane %v1461, 5
        %v1464 = vor.u32 %v1460, %v1463
        %v1465 = vrot.slane %v1464, 4
        %v1467 = vshll.u32 %v1370, 16
        %v1469 = vrot.slane %v1467, 5
        %v1470 = vsel %vm235, %v1465, %v1469
        %v1472 = vshrl.u32 %v1371, 16
        %v1474 = vrot.slane %v1472, 4
        %v1475 = vshll.u32 %v1371, 16
        %v1477 = vrot.slane %v1475, 5
        %v1478 = vor.u32 %v1474, %v1477
        %v1479 = vrot.slane %v1478, 4
        %v1481 = vshll.u32 %v1372, 16
        %v1483 = vrot.slane %v1481, 5
        %v1484 = vsel %vm235, %v1479, %v1483
        %s1485 = scalar_lea.vmem %s210, 56
        %v1486 = vld [vmem:[%s1485] sm:$0xf]
        %v1487 = vld [vmem:[%s1485 + $0x4] sm:$0xf]
        %v1488 = vunpack.c.l.b16 %v1386
        %v1489 = vunpack.c.l.b16 %v1400
        %v1490 = vunpack.c.l.b16 %v1414
        %v1491 = vunpack.c.l.b16 %v1428
        %v1492 = vunpack.c.l.b16 %v1442
        %v1493 = vunpack.c.l.b16 %v1456
        %v1494 = vunpack.c.l.b16 %v1470
        %v1495 = vunpack.c.l.b16 %v1484
        %v1496 = vpack.c.b16 %v1489, %v1488
        %v1497 = vpack.c.b16 %v1491, %v1490
        %v1498 = vpack.c.b16 %v1493, %v1492
        %v1499 = vpack.c.b16 %v1495, %v1494
        %v1502 = vunpack.c.l.b16 %v1486
        %v1503 = vunpack.c.l.b16 %v1487
        %v1504 = vpack.c.b16 %v1503, %v1502
        %v1507 = vsel %vm369, %v1496, 0
        %v1510 = vsel %vm369, %v1497, 0
        %v1513 = vsel %vm369, %v1498, 0
        %v1516 = vsel %vm369, %v1499, 0
        %1518 = vmatprep.subr.bf16.mxu0 0
        %1519 = vmatpush1.bf16.msra.mxu0 %v1504
        %1520 = vmatprep.subr.bf16.mxu0 0
        %1521 = vmatpush1.bf16.msra.mxu0 0
        %1522 = vmatprep.subr.bf16.mxu0 0
        %1523 = vmatpush1.bf16.msra.mxu0 0
        %1524 = vmatprep.subr.bf16.mxu0 0
        %1525 = vmatpush1.bf16.msra.mxu0 0
        %1526 = vmatprep.subr.bf16.mxu0 0
        %1527 = vmatpush1.bf16.msra.mxu0 0
        %1528 = vmatprep.subr.bf16.mxu0 0
        %1529 = vmatpush1.bf16.msra.mxu0 0
        %1530 = vmatprep.subr.bf16.mxu0 0
        %1531 = vmatpush1.bf16.msra.mxu0 0
        %1532 = vmatprep.subr.bf16.mxu0 0
        %1533 = vmatpush1.bf16.msra.mxu0 0
        %1534 = vmatprep.subr.bf16.mxu0 0
        %1535 = vmatpush1.bf16.msra.mxu0 0
        %1536 = vmatprep.subr.bf16.mxu0 0
        %1537 = vmatpush1.bf16.msra.mxu0 0
        %1538 = vmatprep.subr.bf16.mxu0 0
        %1539 = vmatpush1.bf16.msra.mxu0 0
        %1540 = vmatprep.subr.bf16.mxu0 0
        %1541 = vmatpush1.bf16.msra.mxu0 0
        %1542 = vmatprep.subr.bf16.mxu0 0
        %1543 = vmatpush1.bf16.msra.mxu0 0
        %1544 = vmatprep.subr.bf16.mxu0 0
        %1545 = vmatpush1.bf16.msra.mxu0 0
        %1546 = vmatprep.subr.bf16.mxu0 0
        %1547 = vmatpush1.bf16.msra.mxu0 0
        %1548 = vmatprep.subr.bf16.mxu0 0
        %1549 = vmatpush1.bf16.msra.mxu0 0
        %1550 = vmatprep.mubr.bf16.mxu0 0
        %1551 = vmatmul.mubr.bf16.gmra.mrb[0].mxu0 %v1507
        %v1552 = vpop.f32.mrb[0].mxu0
        %v1553 = vadd.f32 0.0, %v1552
        %v1554 = vpop.f32.mrb[0].mxu0
        %v1555 = vpop.f32.mrb[0].mxu0
        %v1556 = vadd.f32 0.0, %v1555
        %v1557 = vpop.f32.mrb[0].mxu0
        %1558 = vmatprep.mubr.bf16.mxu0 0
        %1559 = vmatmul.mubr.bf16.gmra.mrb[0].mxu0 %v1510
        %v1560 = vpop.f32.mrb[0].mxu0
        %v1561 = vadd.f32 0.0, %v1560
        %v1562 = vpop.f32.mrb[0].mxu0
        %v1563 = vpop.f32.mrb[0].mxu0
        %v1564 = vadd.f32 0.0, %v1563
        %v1565 = vpop.f32.mrb[0].mxu0
        %1566 = vmatprep.mubr.bf16.mxu0 0
        %1567 = vmatmul.mubr.bf16.gmra.mrb[0].mxu0 %v1513
        %v1568 = vpop.f32.mrb[0].mxu0
        %v1569 = vadd.f32 0.0, %v1568
        %v1570 = vpop.f32.mrb[0].mxu0
        %v1571 = vpop.f32.mrb[0].mxu0
        %v1572 = vadd.f32 0.0, %v1571
        %v1573 = vpop.f32.mrb[0].mxu0
        %1574 = vmatprep.mubr.bf16.mxu0 0
        %1575 = vmatmul.mubr.bf16.gmra.mrb[0].mxu0 %v1516
        %v1576 = vpop.f32.mrb[0].mxu0
        %v1577 = vadd.f32 0.0, %v1576
        %v1578 = vpop.f32.mrb[0].mxu0
        %v1579 = vpop.f32.mrb[0].mxu0
        %v1580 = vadd.f32 0.0, %v1579
        %v1581 = vpop.f32.mrb[0].mxu0
        %1582 = vdwg.mxu0
        %v1583 = vadd.f32 %v1349, %v1553
        %v1584 = vadd.f32 %v1350, %v1556
        %v1585 = vadd.f32 %v1351, %v1561
        %v1586 = vadd.f32 %v1352, %v1564
        %v1587 = vadd.f32 %v1353, %v1569
        %v1588 = vadd.f32 %v1354, %v1572
        %v1589 = vadd.f32 %v1355, %v1577
        %v1590 = vadd.f32 %v1356, %v1580
        %v1591 = vld [vmem:[%s1234] sm:$0xe]
        %v1592 = vld [vmem:[%s1234 + $0x8] sm:$0xe]
        %v1593 = vld [vmem:[%s1234 + $0x10] sm:$0xe]
        %v1594 = vld [vmem:[%s1234 + $0x18] sm:$0xe]
        %v1595 = vld [vmem:[%s1234 + $0x20] sm:$0xe]
        %v1596 = vld [vmem:[%s1234 + $0x28] sm:$0xe]
        %v1597 = vld [vmem:[%s1234 + $0x30] sm:$0xe]
        %v1598 = vld [vmem:[%s1234 + $0x38] sm:$0xe]
        %v1615 = vrot.slane %v1591, 5
        %v1616 = vrot.slane %v1615, 4
        %v1617 = vrot.slane %v1358, 5
        %v1618 = vsel %vm576, %v1616, %v1617
        %v1619 = vrot.slane %v1592, 5
        %v1620 = vrot.slane %v1619, 4
        %v1621 = vrot.slane %v1360, 5
        %v1622 = vsel %vm576, %v1620, %v1621
        %v1623 = vrot.slane %v1593, 5
        %v1624 = vrot.slane %v1623, 4
        %v1625 = vrot.slane %v1362, 5
        %v1626 = vsel %vm576, %v1624, %v1625
        %v1627 = vrot.slane %v1594, 5
        %v1628 = vrot.slane %v1627, 4
        %v1629 = vrot.slane %v1364, 5
        %v1630 = vsel %vm576, %v1628, %v1629
        %v1631 = vrot.slane %v1595, 5
        %v1632 = vrot.slane %v1631, 4
        %v1633 = vrot.slane %v1366, 5
        %v1634 = vsel %vm576, %v1632, %v1633
        %v1635 = vrot.slane %v1596, 5
        %v1636 = vrot.slane %v1635, 4
        %v1637 = vrot.slane %v1368, 5
        %v1638 = vsel %vm576, %v1636, %v1637
        %v1639 = vrot.slane %v1597, 5
        %v1640 = vrot.slane %v1639, 4
        %v1641 = vrot.slane %v1370, 5
        %v1642 = vsel %vm576, %v1640, %v1641
        %v1643 = vrot.slane %v1598, 5
        %v1644 = vrot.slane %v1643, 4
        %v1645 = vrot.slane %v1372, 5
        %v1646 = vsel %vm576, %v1644, %v1645
        %s1647 = scalar_lea.vmem %s210, 64
        %v1648 = vld [vmem:[%s1647] sm:$0xf]
        %v1649 = vld [vmem:[%s1647 + $0x4] sm:$0xf]
        %v1650 = vunpack.c.l.b16 %v1618
        %v1651 = vunpack.c.l.b16 %v1622
        %v1652 = vunpack.c.l.b16 %v1626
        %v1653 = vunpack.c.l.b16 %v1630
        %v1654 = vunpack.c.l.b16 %v1634
        %v1655 = vunpack.c.l.b16 %v1638
        %v1656 = vunpack.c.l.b16 %v1642
        %v1657 = vunpack.c.l.b16 %v1646
        %v1658 = vpack.c.b16 %v1651, %v1650
        %v1659 = vpack.c.b16 %v1653, %v1652
        %v1660 = vpack.c.b16 %v1655, %v1654
        %v1661 = vpack.c.b16 %v1657, %v1656
        %v1664 = vunpack.c.l.b16 %v1648
        %v1665 = vunpack.c.l.b16 %v1649
        %v1666 = vpack.c.b16 %v1665, %v1664
        %v1669 = vsel %vm369, %v1658, 0
        %v1672 = vsel %vm369, %v1659, 0
        %v1675 = vsel %vm369, %v1660, 0
        %v1678 = vsel %vm369, %v1661, 0
        %1680 = vmatprep.subr.bf16.mxu0 0
        %1681 = vmatpush1.bf16.msra.mxu0 %v1666
        %1682 = vmatprep.subr.bf16.mxu0 0
        %1683 = vmatpush1.bf16.msra.mxu0 0
        %1684 = vmatprep.subr.bf16.mxu0 0
        %1685 = vmatpush1.bf16.msra.mxu0 0
        %1686 = vmatprep.subr.bf16.mxu0 0
        %1687 = vmatpush1.bf16.msra.mxu0 0
        %1688 = vmatprep.subr.bf16.mxu0 0
        %1689 = vmatpush1.bf16.msra.mxu0 0
        %1690 = vmatprep.subr.bf16.mxu0 0
        %1691 = vmatpush1.bf16.msra.mxu0 0
        %1692 = vmatprep.subr.bf16.mxu0 0
        %1693 = vmatpush1.bf16.msra.mxu0 0
        %1694 = vmatprep.subr.bf16.mxu0 0
        %1695 = vmatpush1.bf16.msra.mxu0 0
        %1696 = vmatprep.subr.bf16.mxu0 0
        %1697 = vmatpush1.bf16.msra.mxu0 0
        %1698 = vmatprep.subr.bf16.mxu0 0
        %1699 = vmatpush1.bf16.msra.mxu0 0
        %1700 = vmatprep.subr.bf16.mxu0 0
        %1701 = vmatpush1.bf16.msra.mxu0 0
        %1702 = vmatprep.subr.bf16.mxu0 0
        %1703 = vmatpush1.bf16.msra.mxu0 0
        %1704 = vmatprep.subr.bf16.mxu0 0
        %1705 = vmatpush1.bf16.msra.mxu0 0
        %1706 = vmatprep.subr.bf16.mxu0 0
        %1707 = vmatpush1.bf16.msra.mxu0 0
        %1708 = vmatprep.subr.bf16.mxu0 0
        %1709 = vmatpush1.bf16.msra.mxu0 0
        %1710 = vmatprep.subr.bf16.mxu0 0
        %1711 = vmatpush1.bf16.msra.mxu0 0
        %1712 = vmatprep.mubr.bf16.mxu0 0
        %1713 = vmatmul.mubr.bf16.gmra.mrb[0].mxu0 %v1669
        %v1714 = vpop.f32.mrb[0].mxu0
        %v1715 = vadd.f32 0.0, %v1714
        %v1716 = vpop.f32.mrb[0].mxu0
        %v1717 = vpop.f32.mrb[0].mxu0
        %v1718 = vadd.f32 0.0, %v1717
        %v1719 = vpop.f32.mrb[0].mxu0
        %1720 = vmatprep.mubr.bf16.mxu0 0
        %1721 = vmatmul.mubr.bf16.gmra.mrb[0].mxu0 %v1672
        %v1722 = vpop.f32.mrb[0].mxu0
        %v1723 = vadd.f32 0.0, %v1722
        %v1724 = vpop.f32.mrb[0].mxu0
        %v1725 = vpop.f32.mrb[0].mxu0
        %v1726 = vadd.f32 0.0, %v1725
        %v1727 = vpop.f32.mrb[0].mxu0
        %1728 = vmatprep.mubr.bf16.mxu0 0
        %1729 = vmatmul.mubr.bf16.gmra.mrb[0].mxu0 %v1675
        %v1730 = vpop.f32.mrb[0].mxu0
        %v1731 = vadd.f32 0.0, %v1730
        %v1732 = vpop.f32.mrb[0].mxu0
        %v1733 = vpop.f32.mrb[0].mxu0
        %v1734 = vadd.f32 0.0, %v1733
        %v1735 = vpop.f32.mrb[0].mxu0
        %1736 = vmatprep.mubr.bf16.mxu0 0
        %1737 = vmatmul.mubr.bf16.gmra.mrb[0].mxu0 %v1678
        %v1738 = vpop.f32.mrb[0].mxu0
        %v1739 = vadd.f32 0.0, %v1738
        %v1740 = vpop.f32.mrb[0].mxu0
        %v1741 = vpop.f32.mrb[0].mxu0
        %v1742 = vadd.f32 0.0, %v1741
        %v1743 = vpop.f32.mrb[0].mxu0
        %1744 = vdwg.mxu0
        %v1745 = vadd.f32 %v1583, %v1715
        %v1746 = vadd.f32 %v1584, %v1718
        %v1747 = vadd.f32 %v1585, %v1723
        %v1748 = vadd.f32 %v1586, %v1726
        %v1749 = vadd.f32 %v1587, %v1731
        %v1750 = vadd.f32 %v1588, %v1734
        %v1751 = vadd.f32 %v1589, %v1739
        %v1752 = vadd.f32 %v1590, %v1742
        %v1753 = vld [vmem:[%s213] sm:$0x1]
        %v1755 = vlaneseq
        %v1756 = vshrl.u32 %v1755, 7
        %v1757 = vsub.s32 0, %v1756
        %v1758 = vrot.slane %v1753, %v1757
        %v1760 = vadd.f32 %v1745, %v1758
        %v1761 = vadd.f32 %v1746, %v1758
        %v1762 = vadd.f32 %v1747, %v1758
        %v1763 = vadd.f32 %v1748, %v1758
        %v1764 = vadd.f32 %v1749, %v1758
        %v1765 = vadd.f32 %v1750, %v1758
        %v1766 = vadd.f32 %v1751, %v1758
        %v1767 = vadd.f32 %v1752, %v1758
        %v1768 = vmax.f32 %v1760, 0.0
        %v1769 = vmax.f32 %v1761, 0.0
        %v1770 = vmax.f32 %v1762, 0.0
        %v1771 = vmax.f32 %v1763, 0.0
        %v1772 = vmax.f32 %v1764, 0.0
        %v1773 = vmax.f32 %v1765, 0.0
        %v1774 = vmax.f32 %v1766, 0.0
        %v1775 = vmax.f32 %v1767, 0.0
        %v1776 = vpack.c.bf16 %v1768, %v1768
        %v1777 = vpack.c.bf16 %v1769, %v1769
        %v1778 = vpack.c.bf16 %v1770, %v1770
        %v1779 = vpack.c.bf16 %v1771, %v1771
        %v1780 = vpack.c.bf16 %v1772, %v1772
        %v1781 = vpack.c.bf16 %v1773, %v1773
        %v1782 = vpack.c.bf16 %v1774, %v1774
        %v1783 = vpack.c.bf16 %v1775, %v1775
        %vm1784 = vcmask 257024
        %1785 = vst.msk [vmem:[%s201] sm:$0xf] %vm1784, %v1776
        %1786 = vst.msk [vmem:[%s201 + $0x4] sm:$0xf] %vm1784, %v1777
        %1787 = vst.msk [vmem:[%s201 + $0x8] sm:$0xf] %vm1784, %v1778
        %1788 = vst.msk [vmem:[%s201 + $0xc] sm:$0xf] %vm1784, %v1779
        %1789 = vst.msk [vmem:[%s201 + $0x10] sm:$0xf] %vm1784, %v1780
        %1790 = vst.msk [vmem:[%s201 + $0x14] sm:$0xf] %vm1784, %v1781
        %1791 = vst.msk [vmem:[%s201 + $0x18] sm:$0xf] %vm1784, %v1782
        %1792 = vst.msk [vmem:[%s201 + $0x1c] sm:$0xf] %vm1784, %v1783
        %s1793 = sand.u32 %s117, 1
        %s1794 = scalar_lea.sflag [#allocation3], %s1793
        %s1795 = sand.u32 %s117, 1
        %s1796 = smul.addr %s1795, 32
        %s1797 = scalar_lea.vmem [#allocation2], %s1796
        // Predicated region
        $region33: #{tpu_custom_call.1} parent=31 // pred_check
          %p1798 = pneg %p127
        $region34: #{tpu_custom_call.1} parent=31 // pred_check_branch
          %1800 = sbr.rel (%p1798) target = $region36
        $region35: #{tpu_custom_call.1} parent=31 // pred_region
          %s1802 = ssub.s32 512, 512
          %1803 = vsyncadd %s1794, %s1802
          %s1804 = smul.addr %s21, 8
          %s1805 = sadd.s32 %s22, %s1804
          %s1806 = smul.addr %s1805, 64
          %s1807 = scalar_lea.hbm %s3, %s1806
          %s1808 = sshll.u32 %s1797, 4
          %s1809 = int_to_ptr.vmem [resolvable:$true] %s1808
          %1814 = dma.vmem_to_hbm [thread:$0]  %s1809, 512, %s1807, %s1794, 64, 64, 4
        $region36: #{tpu_custom_call.1} parent=31 // pred_fallthru
          _
      $region32: #{tpu_custom_call.1} parent=5 // pred_fallthru
        _
      %p1815 = scmp.le.s32.totalorder 2, %s12
      // Predicated region
      $region37: #{tpu_custom_call.1} parent=5 // pred_check
        %p1816 = pneg %p1815
      $region38: #{tpu_custom_call.1} parent=5 // pred_check_branch
        %1818 = sbr.rel (%p1816) target = $region40
      $region39: #{tpu_custom_call.1} parent=5 // pred_region
        %s1819 = ssub.s32 %s12, 2
        // Predicated region
        $region41: #{tpu_custom_call.1} parent=39 // pred_check
          %p1820 = pneg %p133
        $region42: #{tpu_custom_call.1} parent=39 // pred_check_branch
          %1822 = sbr.rel (%p1820) target = $region44
        $region43: #{tpu_custom_call.1} parent=39 // pred_region
          %s1823 = sand.u32 %s118, 1
          %s1824 = scalar_lea.sflag [#allocation3], %s1823
          %s1825 = sand.u32 %s118, 1
          %s1826 = smul.addr %s1825, 32
          %s1827 = scalar_lea.vmem [#allocation2], %s1826
          %1828 = dma.done %s1824, 512
        $region44: #{tpu_custom_call.1} parent=39 // pred_fallthru
          _
      $region40: #{tpu_custom_call.1} parent=5 // pred_fallthru
        _
    $region6: #{tpu_custom_call.1} parent=1 // loop_footer
      %s16 = sadd.s32 1, %s12
    $region7: #{tpu_custom_call.1} parent=1 // loop_footer_branch
      %11 = sbr.rel target = $region3
    $region8: #{tpu_custom_call.1} parent=1 // loop_exit
      _
    %1829 = vsyncpa [#allocation3], 1
    %s1830 = scalar_lea.sflag [#allocation3], 1
    %1831 = vsyncpa %s1830, 1

</llo_original>
